<compile_context>
chip_gen: v6e
topology: v6e:2x2x1
jax: 0.10.0
libtpu: 0.0.40
codegen_flags: <defaults>
</compile_context>

<pallas_src>
import math
import re

import jax
import jax.numpy as jnp
from jax.experimental import pallas as pl
from jax.experimental.pallas import tpu as pltpu


NEG_SLOPE = 0.01          # nn.LeakyReLU() default negative_slope
LATENT_DIM = 32           # forward() concatenates a 32-wide latent
HEAD_LANES = 128          # packed, lane-dense output width
TAIL_ROWS = 160           # stacked tail weights: fc5_1(64)|fc5_2(16)|fc5_3(16)|fc6_1(64)
N_BIAS_ROWS = 10


def _tpu_generation():
    try:
        kind = jax.devices()[0].device_kind
    except Exception:
        return 0
    m = re.search(r"(\d+)", kind)
    return int(m.group(1)) if m else 0


def _make_kernel(hidden, epilogue_dtype):
    H8, H6, H4, H2 = hidden * 8, hidden * 6, hidden * 4, hidden * 2

    def kernel(x_ref, lat_ref,
               w1, w2, w3, w4, w5, w6a, w6b, w_h0, w_tail, bias_ref,
               out_ref):

        def mm(h, w):
            # bf16 MXU inputs, f32 accumulation.
            return jnp.dot(h.astype(w.dtype), w,
                           preferred_element_type=jnp.float32)

        def bias(row, n):
            return bias_ref[row:row + 1, 0:n]          # f32 (1, n) row

        def act(y):
            return jnp.where(y > 0, y, NEG_SLOPE * y)

        def lin(h, w, row, n):
            # MXU result cast to the epilogue dtype before bias + LeakyReLU
            # (bf16 on v6e/v7x, f32 on v5e).
            y = mm(h, w).astype(epilogue_dtype) + bias(row, n).astype(epilogue_dtype)
            return act(y)

        h = x_ref[...]
        # fc1 .. fc5  (Linear + LeakyReLU; Dropout == identity at inference)
        h = lin(h, w1[...], 0, H8)
        h = lin(h, w2[...], 1, H6)
        h = lin(h, w3[...], 2, H4)
        h = lin(h, w4[...], 3, H2)
        h = lin(h, w5[...], 4, hidden)
        # fc6 over torch.cat([h, latent], dim=1) as a split matmul
        # (avoids a lane-axis concat / relayout).
        y6 = (mm(h, w6a[...]) + mm(lat_ref[...], w6b[...])).astype(epilogue_dtype) \
            + bias(5, hidden).astype(epilogue_dtype)
        h = act(y6)
        # Fused head stage 0: [fc5_0 | fc6_0] in one (hidden, 64) matmul.
        # hd lanes 0..31 = rf path, lanes 32..63 = num path.
        hd = lin(h, w_h0[...], 6, 64)
        # rf tail via K-zero-padded weights (no lane slicing of hd):
        rf = lin(hd, w_tail[0:64, 0:16], 7, 16)    # fc5_1
        rf = lin(rf, w_tail[64:80, 0:16], 8, 16)   # fc5_2 (8 real lanes + 8 zero)
        # Final projections packed into one lane-dense (TM, 128) tile:
        #   col 0 = fc5_3(rf),  cols 1..3 = fc6_1(num half of hd),  rest = 0
        out = (mm(rf, w_tail[80:96, :])
               + mm(hd, w_tail[96:160, :])
               + bias(9, HEAD_LANES))
        out_ref[...] = out.astype(out_ref.dtype)

    return kernel


def make_params(key, input_size, hidden_size):
    """Deterministic init mimicking nn.Linear default U(-1/sqrt(in), 1/sqrt(in))."""
    dims = [
        (input_size, hidden_size * 8),            # fc1
        (hidden_size * 8, hidden_size * 6),       # fc2
        (hidden_size * 6, hidden_size * 4),       # fc3
        (hidden_size * 4, hidden_size * 2),       # fc4
        (hidden_size * 2, hidden_size),           # fc5
        (hidden_size + LATENT_DIM, hidden_size),  # fc6
        (hidden_size, 32),                        # fc5_0
        (32, 16),                                 # fc5_1
        (16, 8),                                  # fc5_2
        (8, 1),                                   # fc5_3
        (hidden_size, 32),                        # fc6_0
        (32, 3),                                  # fc6_1
    ]
    params = []
    for (fan_in, fan_out) in dims:
        key, kw, kb = jax.random.split(key, 3)
        bound = 1.0 / math.sqrt(fan_in)
        w = jax.random.uniform(kw, (fan_in, fan_out), jnp.float32, -bound, bound)
        b = jax.random.uniform(kb, (1, fan_out), jnp.float32, -bound, bound)
        params.append((w, b))
    return params


def _pack_inputs(params, hidden, compute_dtype=jnp.bfloat16):
    """Split fc6, fuse fc5_0|fc6_0, stack the fixed-size tail weights into one
    K-row-padded bf16 buffer, and consolidate all biases into one f32 array."""
    ((w1, b1), (w2, b2), (w3, b3), (w4, b4), (w5, b5), (w6, b6),
     (w50, b50), (w51, b51), (w52, b52), (w53, b53), (w60, b60), (w61, b61)) = params

    w6a = w6[:hidden, :]          # rows consumed by h
    w6b = w6[hidden:, :]          # rows consumed by latent

    # Fused head stage 0: [fc5_0 | fc6_0] share input h.
    w_h0 = jnp.concatenate([w50, w60], axis=1)        # (hidden, 64)
    b_h0 = jnp.concatenate([b50, b60], axis=1)        # (1, 64)

    # Tail weight stack (rows are the K axis, zero-padded so downstream
    # matmuls consume the fused/packed activations directly):
    #   rows   0: 64  fc5_1  K=64 (rf half of hd, num half zeroed) -> 16 lanes
    #   rows  64: 80  fc5_2  K=16 -> 8 real lanes, padded to 16
    #   rows  80: 96  fc5_3  K=16 (rows 8..15 zero) -> col 0
    #   rows  96:160  fc6_1  K=64 (num half of hd)  -> cols 1..3
    tail = jnp.zeros((TAIL_ROWS, HEAD_LANES), jnp.float32)
    tail = tail.at[0:32, 0:16].set(w51)
    tail = tail.at[64:80, 0:8].set(w52)
    tail = tail.at[80:88, 0:1].set(w53)
    tail = tail.at[128:160, 1:4].set(w61)

    # All biases consolidated into a single f32 operand (one row per layer).
    bw = max(hidden * 8, HEAD_LANES)
    biases = jnp.zeros((N_BIAS_ROWS, bw), jnp.float32)
    biases = biases.at[0:1, 0:hidden * 8].set(b1)
    biases = biases.at[1:2, 0:hidden * 6].set(b2)
    biases = biases.at[2:3, 0:hidden * 4].set(b3)
    biases = biases.at[3:4, 0:hidden * 2].set(b4)
    biases = biases.at[4:5, 0:hidden].set(b5)
    biases = biases.at[5:6, 0:hidden].set(b6)
    biases = biases.at[6:7, 0:64].set(b_h0)
    biases = biases.at[7:8, 0:16].set(b51)
    biases = biases.at[8:9, 0:8].set(b52)
    biases = biases.at[9:10, 0:1].set(b53)
    biases = biases.at[9:10, 1:4].set(b61)

    weights = [w1, w2, w3, w4, w5, w6a, w6b, w_h0, tail]
    weights = [w.astype(compute_dtype) for w in weights]
    return weights, biases


def discriminator_forward(x_nchw, latent, params, hidden_size,
                          compute_dtype=jnp.bfloat16):
    B = x_nchw.shape[0]
    gen = _tpu_generation()
    newer = gen >= 6                      # v6e / v7x: bf16 VPU + 256-wide MXU M
    epilogue_dtype = compute_dtype if newer else jnp.float32
    tm_cap = 256 if newer else 128

    # Streamed activations shipped as bf16 (halves the dominant input DMA).
    x = x_nchw.reshape(B, -1).astype(compute_dtype)   # flatten(start_dim=1)
    latent = latent.astype(compute_dtype)
    f_in = x.shape[1]

    # Batch tile: multiple of 16 (bf16 sublane packing), capped per generation.
    TM = min(tm_cap, 16 * pl.cdiv(B, 16))
    n_tiles = pl.cdiv(B, TM)
    b_pad = TM * n_tiles
    if b_pad != B:
        x = jnp.pad(x, ((0, b_pad - B), (0, 0)))
        latent = jnp.pad(latent, ((0, b_pad - B), (0, 0)))

    weights, biases = _pack_inputs(params, hidden_size, compute_dtype)
    inputs = [x, latent] + weights + [biases]

    # Batch-tiled activations, grid-resident weights/biases.
    in_specs = [
        pl.BlockSpec((TM, f_in), lambda i: (i, 0)),
        pl.BlockSpec((TM, LATENT_DIM), lambda i: (i, 0)),
    ] + [pl.BlockSpec(t.shape, lambda i: (0, 0)) for t in weights + [biases]]
    out_spec = pl.BlockSpec((TM, HEAD_LANES), lambda i: (i, 0))

    # Advisory cost estimate so XLA schedules around the custom call.
    flops = 2 * b_pad * sum(int(w.shape[0]) * int(w.shape[1]) for w in weights)
    bytes_accessed = (sum(int(t.size) * t.dtype.itemsize for t in inputs)
                      + b_pad * HEAD_LANES * jnp.dtype(compute_dtype).itemsize)
    cost = pl.CostEstimate(flops=flops, transcendentals=0,
                           bytes_accessed=bytes_accessed)

    out = pl.pallas_call(
        _make_kernel(hidden_size, epilogue_dtype),
        out_shape=jax.ShapeDtypeStruct((b_pad, HEAD_LANES), compute_dtype),
        grid=(n_tiles,),
        in_specs=in_specs,
        out_specs=out_spec,
        compiler_params=pltpu.CompilerParams(
            dimension_semantics=("parallel",)),
        cost_estimate=cost,
    )(*inputs)

    rf = out[:B, 0:1].astype(jnp.float32)
    num = out[:B, 1:4].astype(jnp.float32)
    return rf, num


def discriminator_reference(x_nchw, latent, params, compute_dtype=jnp.bfloat16,
                            epilogue_dtype=jnp.float32):
    """Pure-JAX reference mirroring the kernel's numerics (bf16 MXU inputs,
    f32 accumulation, generation-dependent epilogue dtype, bf16 output store)
    with the original concat-based fc6 and unfused heads."""
    B = x_nchw.shape[0]
    h = x_nchw.reshape(B, -1).astype(jnp.float32)

    def lin(h, wb, act=True):
        w, b = wb
        y = jnp.dot(h.astype(compute_dtype), w.astype(compute_dtype),
                    preferred_element_type=jnp.float32)
        if act:
            y = y.astype(epilogue_dtype) + b.astype(epilogue_dtype)
            return jnp.where(y > 0, y, NEG_SLOPE * y)
        return y + b.astype(jnp.float32)

    h = lin(h, params[0]); h = lin(h, params[1]); h = lin(h, params[2])
    h = lin(h, params[3]); h = lin(h, params[4])
    h = jnp.concatenate([h.astype(jnp.float32),
                         latent.astype(jnp.float32)], axis=1)
    h = lin(h, params[5])
    rf = lin(h, params[6]); rf = lin(rf, params[7]); rf = lin(rf, params[8])
    rf = lin(rf, params[9], act=False)
    nd = lin(h, params[10]); nd = lin(nd, params[11], act=False)
    # Mirror the kernel's bf16 output store.
    rf = rf.astype(compute_dtype).astype(jnp.float32)
    nd = nd.astype(compute_dtype).astype(jnp.float32)
    return rf, nd


if __name__ == "__main__":
    # X = (B, C, H, W) -> input_size = C*H*W
    B, C, H, W = 2, 4, 16, 16
    input_size = C * H * W       # 1024
    hidden_size = 32

    key = jax.random.PRNGKey(0)
    kx, kl, kp = jax.random.split(key, 3)
    x = jax.random.normal(kx, (B, C, H, W), jnp.float32)
    latent = jax.random.normal(kl, (B, LATENT_DIM), jnp.float32)
    params = make_params(kp, input_size, hidden_size)

    rf, num = discriminator_forward(x, latent, params, hidden_size)
    jax.block_until_ready((rf, num))

    ep = jnp.bfloat16 if _tpu_generation() >= 6 else jnp.float32
    rf_ref, num_ref = discriminator_reference(x, latent, params,
                                              epilogue_dtype=ep)
    assert rf.shape == (B, 1) and num.shape == (B, 3)
    # Tolerance covers bf16-level rounding differences (contraction order
    # between the fused kernel and the layer-by-layer reference).
    assert jnp.allclose(rf, rf_ref, atol=2e-2, rtol=2e-2)
    assert jnp.allclose(num, num_ref, atol=2e-2, rtol=2e-2)

    # TODO(synk): Dropout(0.3) is reproduced in eval mode (identity); training-mode
    # stochastic masking (pltpu.prng_seed / prng_random_bits) is not implemented.
    print("KERNEL_OK")
</pallas_src>

<mosaic_0001>
module attributes {stable_mosaic.version = 11 : i64} {
  func.func @kernel(%arg0: i32, %arg1: memref<16x1024xbf16, #tpu.memory_space<vmem>>, %arg2: memref<16x32xbf16, #tpu.memory_space<vmem>>, %arg3: memref<1024x256xbf16, #tpu.memory_space<vmem>>, %arg4: memref<256x192xbf16, #tpu.memory_space<vmem>>, %arg5: memref<192x128xbf16, #tpu.memory_space<vmem>>, %arg6: memref<128x64xbf16, #tpu.memory_space<vmem>>, %arg7: memref<64x32xbf16, #tpu.memory_space<vmem>>, %arg8: memref<32x32xbf16, #tpu.memory_space<vmem>>, %arg9: memref<32x32xbf16, #tpu.memory_space<vmem>>, %arg10: memref<32x64xbf16, #tpu.memory_space<vmem>>, %arg11: memref<160x128xbf16, #tpu.memory_space<vmem>>, %arg12: memref<10x256xf32, #tpu.memory_space<vmem>>, %arg13: memref<16x128xbf16, #tpu.memory_space<vmem>>) attributes {dimension_semantics = [#tpu.dimension_semantics<parallel>], iteration_bounds = array<i64: 1>, scalar_prefetch = 0 : i64, scratch_operands = 0 : i64, tpu.core_type = #tpu.core_type<tc>, window_params = [{transform_indices = @transform_0, window_bounds = array<i64: 16, 1024>}, {transform_indices = @transform_1, window_bounds = array<i64: 16, 32>}, {pipeline_mode = #tpu.pipeline_mode<synchronous>, transform_indices = @transform_2, window_bounds = array<i64: 1024, 256>}, {pipeline_mode = #tpu.pipeline_mode<synchronous>, transform_indices = @transform_3, window_bounds = array<i64: 256, 192>}, {pipeline_mode = #tpu.pipeline_mode<synchronous>, transform_indices = @transform_4, window_bounds = array<i64: 192, 128>}, {pipeline_mode = #tpu.pipeline_mode<synchronous>, transform_indices = @transform_5, window_bounds = array<i64: 128, 64>}, {pipeline_mode = #tpu.pipeline_mode<synchronous>, transform_indices = @transform_6, window_bounds = array<i64: 64, 32>}, {pipeline_mode = #tpu.pipeline_mode<synchronous>, transform_indices = @transform_7, window_bounds = array<i64: 32, 32>}, {pipeline_mode = #tpu.pipeline_mode<synchronous>, transform_indices = @transform_8, window_bounds = array<i64: 32, 32>}, {pipeline_mode = #tpu.pipeline_mode<synchronous>, transform_indices = @transform_9, window_bounds = array<i64: 32, 64>}, {pipeline_mode = #tpu.pipeline_mode<synchronous>, transform_indices = @transform_10, window_bounds = array<i64: 160, 128>}, {pipeline_mode = #tpu.pipeline_mode<synchronous>, transform_indices = @transform_11, window_bounds = array<i64: 10, 256>}, {transform_indices = @transform_12, window_bounds = array<i64: 16, 128>}]} {
    %c0 = arith.constant 0 : index
    %c0_0 = arith.constant 0 : index
    %0 = vector.load %arg1[%c0, %c0_0] : memref<16x1024xbf16, #tpu.memory_space<vmem>>, vector<16x1024xbf16>
    %c0_1 = arith.constant 0 : index
    %c0_2 = arith.constant 0 : index
    %1 = vector.load %arg3[%c0_1, %c0_2] : memref<1024x256xbf16, #tpu.memory_space<vmem>>, vector<1024x256xbf16>
    %cst = arith.constant dense<0.000000e+00> : vector<16x256xf32>
    %2 = tpu.matmul %0, %1, %cst {dimension_numbers = #tpu.dot_dimension_numbers<[1], [0], [0], [1], [0, 0, 1, 1], [], []>} : vector<16x1024xbf16>, vector<1024x256xbf16>, vector<16x256xf32> -> vector<16x256xf32>
    %c0_3 = arith.constant 0 : index
    %c0_4 = arith.constant 0 : index
    %3 = vector.load %arg12[%c0_3, %c0_4] : memref<10x256xf32, #tpu.memory_space<vmem>>, vector<1x256xf32>
    %4 = vector.broadcast %3 : vector<1x256xf32> to vector<16x256xf32>
    %5 = arith.addf %2, %4 : vector<16x256xf32>
    %cst_5 = arith.constant 0.000000e+00 : f32
    %6 = vector.broadcast %cst_5 : f32 to vector<16x256xf32>
    %7 = arith.cmpf ogt, %5, %6 : vector<16x256xf32>
    %cst_6 = arith.constant 0.00999999977 : f32
    %8 = vector.broadcast %cst_6 : f32 to vector<16x256xf32>
    %9 = arith.mulf %8, %5 : vector<16x256xf32>
    %10 = arith.select %7, %5, %9 : vector<16x256xi1>, vector<16x256xf32>
    %c0_7 = arith.constant 0 : index
    %c0_8 = arith.constant 0 : index
    %11 = vector.load %arg4[%c0_7, %c0_8] : memref<256x192xbf16, #tpu.memory_space<vmem>>, vector<256x192xbf16>
    %12 = arith.truncf %10 : vector<16x256xf32> to vector<16x256xbf16>
    %cst_9 = arith.constant dense<0.000000e+00> : vector<16x192xf32>
    %13 = tpu.matmul %12, %11, %cst_9 {dimension_numbers = #tpu.dot_dimension_numbers<[1], [0], [0], [1], [0, 0, 1, 1], [], []>} : vector<16x256xbf16>, vector<256x192xbf16>, vector<16x192xf32> -> vector<16x192xf32>
    %c1 = arith.constant 1 : index
    %c0_10 = arith.constant 0 : index
    %14 = vector.load %arg12[%c1, %c0_10] : memref<10x256xf32, #tpu.memory_space<vmem>>, vector<1x192xf32>
    %15 = vector.broadcast %14 : vector<1x192xf32> to vector<16x192xf32>
    %16 = arith.addf %13, %15 : vector<16x192xf32>
    %cst_11 = arith.constant 0.000000e+00 : f32
    %17 = vector.broadcast %cst_11 : f32 to vector<16x192xf32>
    %18 = arith.cmpf ogt, %16, %17 : vector<16x192xf32>
    %cst_12 = arith.constant 0.00999999977 : f32
    %19 = vector.broadcast %cst_12 : f32 to vector<16x192xf32>
    %20 = arith.mulf %19, %16 : vector<16x192xf32>
    %21 = arith.select %18, %16, %20 : vector<16x192xi1>, vector<16x192xf32>
    %c0_13 = arith.constant 0 : index
    %c0_14 = arith.constant 0 : index
    %22 = vector.load %arg5[%c0_13, %c0_14] : memref<192x128xbf16, #tpu.memory_space<vmem>>, vector<192x128xbf16>
    %23 = arith.truncf %21 : vector<16x192xf32> to vector<16x192xbf16>
    %cst_15 = arith.constant dense<0.000000e+00> : vector<16x128xf32>
    %24 = tpu.matmul %23, %22, %cst_15 {dimension_numbers = #tpu.dot_dimension_numbers<[1], [0], [0], [1], [0, 0, 1, 1], [], []>} : vector<16x192xbf16>, vector<192x128xbf16>, vector<16x128xf32> -> vector<16x128xf32>
    %c2 = arith.constant 2 : index
    %c0_16 = arith.constant 0 : index
    %25 = vector.load %arg12[%c2, %c0_16] : memref<10x256xf32, #tpu.memory_space<vmem>>, vector<1x128xf32>
    %26 = vector.broadcast %25 : vector<1x128xf32> to vector<16x128xf32>
    %27 = arith.addf %24, %26 : vector<16x128xf32>
    %cst_17 = arith.constant 0.000000e+00 : f32
    %28 = vector.broadcast %cst_17 : f32 to vector<16x128xf32>
    %29 = arith.cmpf ogt, %27, %28 : vector<16x128xf32>
    %cst_18 = arith.constant 0.00999999977 : f32
    %30 = vector.broadcast %cst_18 : f32 to vector<16x128xf32>
    %31 = arith.mulf %30, %27 : vector<16x128xf32>
    %32 = arith.select %29, %27, %31 : vector<16x128xi1>, vector<16x128xf32>
    %c0_19 = arith.constant 0 : index
    %c0_20 = arith.constant 0 : index
    %33 = vector.load %arg6[%c0_19, %c0_20] : memref<128x64xbf16, #tpu.memory_space<vmem>>, vector<128x64xbf16>
    %34 = arith.truncf %32 : vector<16x128xf32> to vector<16x128xbf16>
    %cst_21 = arith.constant dense<0.000000e+00> : vector<16x64xf32>
    %35 = tpu.matmul %34, %33, %cst_21 {dimension_numbers = #tpu.dot_dimension_numbers<[1], [0], [0], [1], [0, 0, 1, 1], [], []>} : vector<16x128xbf16>, vector<128x64xbf16>, vector<16x64xf32> -> vector<16x64xf32>
    %c3 = arith.constant 3 : index
    %c0_22 = arith.constant 0 : index
    %36 = vector.load %arg12[%c3, %c0_22] : memref<10x256xf32, #tpu.memory_space<vmem>>, vector<1x64xf32>
    %37 = vector.broadcast %36 : vector<1x64xf32> to vector<16x64xf32>
    %38 = arith.addf %35, %37 : vector<16x64xf32>
    %cst_23 = arith.constant 0.000000e+00 : f32
    %39 = vector.broadcast %cst_23 : f32 to vector<16x64xf32>
    %40 = arith.cmpf ogt, %38, %39 : vector<16x64xf32>
    %cst_24 = arith.constant 0.00999999977 : f32
    %41 = vector.broadcast %cst_24 : f32 to vector<16x64xf32>
    %42 = arith.mulf %41, %38 : vector<16x64xf32>
    %43 = arith.select %40, %38, %42 : vector<16x64xi1>, vector<16x64xf32>
    %c0_25 = arith.constant 0 : index
    %c0_26 = arith.constant 0 : index
    %44 = vector.load %arg7[%c0_25, %c0_26] : memref<64x32xbf16, #tpu.memory_space<vmem>>, vector<64x32xbf16>
    %45 = arith.truncf %43 : vector<16x64xf32> to vector<16x64xbf16>
    %cst_27 = arith.constant dense<0.000000e+00> : vector<16x32xf32>
    %46 = tpu.matmul %45, %44, %cst_27 {dimension_numbers = #tpu.dot_dimension_numbers<[1], [0], [0], [1], [0, 0, 1, 1], [], []>} : vector<16x64xbf16>, vector<64x32xbf16>, vector<16x32xf32> -> vector<16x32xf32>
    %c4 = arith.constant 4 : index
    %c0_28 = arith.constant 0 : index
    %47 = vector.load %arg12[%c4, %c0_28] : memref<10x256xf32, #tpu.memory_space<vmem>>, vector<1x32xf32>
    %48 = vector.broadcast %47 : vector<1x32xf32> to vector<16x32xf32>
    %49 = arith.addf %46, %48 : vector<16x32xf32>
    %cst_29 = arith.constant 0.000000e+00 : f32
    %50 = vector.broadcast %cst_29 : f32 to vector<16x32xf32>
    %51 = arith.cmpf ogt, %49, %50 : vector<16x32xf32>
    %cst_30 = arith.constant 0.00999999977 : f32
    %52 = vector.broadcast %cst_30 : f32 to vector<16x32xf32>
    %53 = arith.mulf %52, %49 : vector<16x32xf32>
    %54 = arith.select %51, %49, %53 : vector<16x32xi1>, vector<16x32xf32>
    %c0_31 = arith.constant 0 : index
    %c0_32 = arith.constant 0 : index
    %55 = vector.load %arg8[%c0_31, %c0_32] : memref<32x32xbf16, #tpu.memory_space<vmem>>, vector<32x32xbf16>
    %56 = arith.truncf %54 : vector<16x32xf32> to vector<16x32xbf16>
    %cst_33 = arith.constant dense<0.000000e+00> : vector<16x32xf32>
    %57 = tpu.matmul %56, %55, %cst_33 {dimension_numbers = #tpu.dot_dimension_numbers<[1], [0], [0], [1], [0, 0, 1, 1], [], []>} : vector<16x32xbf16>, vector<32x32xbf16>, vector<16x32xf32> -> vector<16x32xf32>
    %c0_34 = arith.constant 0 : index
    %c0_35 = arith.constant 0 : index
    %58 = vector.load %arg2[%c0_34, %c0_35] : memref<16x32xbf16, #tpu.memory_space<vmem>>, vector<16x32xbf16>
    %c0_36 = arith.constant 0 : index
    %c0_37 = arith.constant 0 : index
    %59 = vector.load %arg9[%c0_36, %c0_37] : memref<32x32xbf16, #tpu.memory_space<vmem>>, vector<32x32xbf16>
    %cst_38 = arith.constant dense<0.000000e+00> : vector<16x32xf32>
    %60 = tpu.matmul %58, %59, %cst_38 {dimension_numbers = #tpu.dot_dimension_numbers<[1], [0], [0], [1], [0, 0, 1, 1], [], []>} : vector<16x32xbf16>, vector<32x32xbf16>, vector<16x32xf32> -> vector<16x32xf32>
    %61 = arith.addf %57, %60 : vector<16x32xf32>
    %c5 = arith.constant 5 : index
    %c0_39 = arith.constant 0 : index
    %62 = vector.load %arg12[%c5, %c0_39] : memref<10x256xf32, #tpu.memory_space<vmem>>, vector<1x32xf32>
    %63 = vector.broadcast %62 : vector<1x32xf32> to vector<16x32xf32>
    %64 = arith.addf %61, %63 : vector<16x32xf32>
    %cst_40 = arith.constant 0.000000e+00 : f32
    %65 = vector.broadcast %cst_40 : f32 to vector<16x32xf32>
    %66 = arith.cmpf ogt, %64, %65 : vector<16x32xf32>
    %cst_41 = arith.constant 0.00999999977 : f32
    %67 = vector.broadcast %cst_41 : f32 to vector<16x32xf32>
    %68 = arith.mulf %67, %64 : vector<16x32xf32>
    %69 = arith.select %66, %64, %68 : vector<16x32xi1>, vector<16x32xf32>
    %c0_42 = arith.constant 0 : index
    %c0_43 = arith.constant 0 : index
    %70 = vector.load %arg10[%c0_42, %c0_43] : memref<32x64xbf16, #tpu.memory_space<vmem>>, vector<32x64xbf16>
    %71 = arith.truncf %69 : vector<16x32xf32> to vector<16x32xbf16>
    %cst_44 = arith.constant dense<0.000000e+00> : vector<16x64xf32>
    %72 = tpu.matmul %71, %70, %cst_44 {dimension_numbers = #tpu.dot_dimension_numbers<[1], [0], [0], [1], [0, 0, 1, 1], [], []>} : vector<16x32xbf16>, vector<32x64xbf16>, vector<16x64xf32> -> vector<16x64xf32>
    %c6 = arith.constant 6 : index
    %c0_45 = arith.constant 0 : index
    %73 = vector.load %arg12[%c6, %c0_45] : memref<10x256xf32, #tpu.memory_space<vmem>>, vector<1x64xf32>
    %74 = vector.broadcast %73 : vector<1x64xf32> to vector<16x64xf32>
    %75 = arith.addf %72, %74 : vector<16x64xf32>
    %cst_46 = arith.constant 0.000000e+00 : f32
    %76 = vector.broadcast %cst_46 : f32 to vector<16x64xf32>
    %77 = arith.cmpf ogt, %75, %76 : vector<16x64xf32>
    %cst_47 = arith.constant 0.00999999977 : f32
    %78 = vector.broadcast %cst_47 : f32 to vector<16x64xf32>
    %79 = arith.mulf %78, %75 : vector<16x64xf32>
    %80 = arith.select %77, %75, %79 : vector<16x64xi1>, vector<16x64xf32>
    %c0_48 = arith.constant 0 : index
    %c0_49 = arith.constant 0 : index
    %81 = vector.load %arg11[%c0_48, %c0_49] : memref<160x128xbf16, #tpu.memory_space<vmem>>, vector<64x16xbf16>
    %82 = arith.truncf %80 : vector<16x64xf32> to vector<16x64xbf16>
    %cst_50 = arith.constant dense<0.000000e+00> : vector<16x16xf32>
    %83 = tpu.matmul %82, %81, %cst_50 {dimension_numbers = #tpu.dot_dimension_numbers<[1], [0], [0], [1], [0, 0, 1, 1], [], []>} : vector<16x64xbf16>, vector<64x16xbf16>, vector<16x16xf32> -> vector<16x16xf32>
    %c7 = arith.constant 7 : index
    %c0_51 = arith.constant 0 : index
    %84 = vector.load %arg12[%c7, %c0_51] : memref<10x256xf32, #tpu.memory_space<vmem>>, vector<1x16xf32>
    %85 = vector.broadcast %84 : vector<1x16xf32> to vector<16x16xf32>
    %86 = arith.addf %83, %85 : vector<16x16xf32>
    %cst_52 = arith.constant 0.000000e+00 : f32
    %87 = vector.broadcast %cst_52 : f32 to vector<16x16xf32>
    %88 = arith.cmpf ogt, %86, %87 : vector<16x16xf32>
    %cst_53 = arith.constant 0.00999999977 : f32
    %89 = vector.broadcast %cst_53 : f32 to vector<16x16xf32>
    %90 = arith.mulf %89, %86 : vector<16x16xf32>
    %91 = arith.select %88, %86, %90 : vector<16x16xi1>, vector<16x16xf32>
    %c64 = arith.constant 64 : index
    %c0_54 = arith.constant 0 : index
    %92 = vector.load %arg11[%c64, %c0_54] : memref<160x128xbf16, #tpu.memory_space<vmem>>, vector<16x16xbf16>
    %93 = arith.truncf %91 : vector<16x16xf32> to vector<16x16xbf16>
    %cst_55 = arith.constant dense<0.000000e+00> : vector<16x16xf32>
    %94 = tpu.matmul %93, %92, %cst_55 {dimension_numbers = #tpu.dot_dimension_numbers<[1], [0], [0], [1], [0, 0, 1, 1], [], []>} : vector<16x16xbf16>, vector<16x16xbf16>, vector<16x16xf32> -> vector<16x16xf32>
    %c8 = arith.constant 8 : index
    %c0_56 = arith.constant 0 : index
    %95 = vector.load %arg12[%c8, %c0_56] : memref<10x256xf32, #tpu.memory_space<vmem>>, vector<1x16xf32>
    %96 = vector.broadcast %95 : vector<1x16xf32> to vector<16x16xf32>
    %97 = arith.addf %94, %96 : vector<16x16xf32>
    %cst_57 = arith.constant 0.000000e+00 : f32
    %98 = vector.broadcast %cst_57 : f32 to vector<16x16xf32>
    %99 = arith.cmpf ogt, %97, %98 : vector<16x16xf32>
    %cst_58 = arith.constant 0.00999999977 : f32
    %100 = vector.broadcast %cst_58 : f32 to vector<16x16xf32>
    %101 = arith.mulf %100, %97 : vector<16x16xf32>
    %102 = arith.select %99, %97, %101 : vector<16x16xi1>, vector<16x16xf32>
    %c80 = arith.constant 80 : index
    %c0_59 = arith.constant 0 : index
    %103 = vector.load %arg11[%c80, %c0_59] : memref<160x128xbf16, #tpu.memory_space<vmem>>, vector<16x128xbf16>
    %104 = arith.truncf %102 : vector<16x16xf32> to vector<16x16xbf16>
    %cst_60 = arith.constant dense<0.000000e+00> : vector<16x128xf32>
    %105 = tpu.matmul %104, %103, %cst_60 {dimension_numbers = #tpu.dot_dimension_numbers<[1], [0], [0], [1], [0, 0, 1, 1], [], []>} : vector<16x16xbf16>, vector<16x128xbf16>, vector<16x128xf32> -> vector<16x128xf32>
    %c96 = arith.constant 96 : index
    %c0_61 = arith.constant 0 : index
    %106 = vector.load %arg11[%c96, %c0_61] : memref<160x128xbf16, #tpu.memory_space<vmem>>, vector<64x128xbf16>
    %107 = arith.truncf %80 : vector<16x64xf32> to vector<16x64xbf16>
    %cst_62 = arith.constant dense<0.000000e+00> : vector<16x128xf32>
    %108 = tpu.matmul %107, %106, %cst_62 {dimension_numbers = #tpu.dot_dimension_numbers<[1], [0], [0], [1], [0, 0, 1, 1], [], []>} : vector<16x64xbf16>, vector<64x128xbf16>, vector<16x128xf32> -> vector<16x128xf32>
    %109 = arith.addf %105, %108 : vector<16x128xf32>
    %c9 = arith.constant 9 : index
    %c0_63 = arith.constant 0 : index
    %110 = vector.load %arg12[%c9, %c0_63] : memref<10x256xf32, #tpu.memory_space<vmem>>, vector<1x128xf32>
    %111 = vector.broadcast %110 : vector<1x128xf32> to vector<16x128xf32>
    %112 = arith.addf %109, %111 : vector<16x128xf32>
    %113 = arith.truncf %112 : vector<16x128xf32> to vector<16x128xbf16>
    %c0_64 = arith.constant 0 : index
    %c0_65 = arith.constant 0 : index
    %114 = vector.load %arg13[%c0_64, %c0_65] : memref<16x128xbf16, #tpu.memory_space<vmem>>, vector<16x128xbf16>
    tpu.vector_store %arg13[%c0_64, %c0_65], %113 {strides = array<i32>} : memref<16x128xbf16, #tpu.memory_space<vmem>>, vector<16x128xbf16>,
    return
  }
  func.func @transform_0(%arg0: i32) -> (i32, i32) {
    %c0_i32 = arith.constant 0 : i32
    %c0_i32_0 = arith.constant 0 : i32
    return %arg0, %c0_i32 : i32, i32
  }
  func.func @transform_1(%arg0: i32) -> (i32, i32) {
    %c0_i32 = arith.constant 0 : i32
    %c0_i32_0 = arith.constant 0 : i32
    return %arg0, %c0_i32 : i32, i32
  }
  func.func @transform_2(%arg0: i32) -> (i32, i32) {
    %c0_i32 = arith.constant 0 : i32
    %c0_i32_0 = arith.constant 0 : i32
    %c0_i32_1 = arith.constant 0 : i32
    return %c0_i32, %c0_i32_0 : i32, i32
  }
  func.func @transform_3(%arg0: i32) -> (i32, i32) {
    %c0_i32 = arith.constant 0 : i32
    %c0_i32_0 = arith.constant 0 : i32
    %c0_i32_1 = arith.constant 0 : i32
    return %c0_i32, %c0_i32_0 : i32, i32
  }
  func.func @transform_4(%arg0: i32) -> (i32, i32) {
    %c0_i32 = arith.constant 0 : i32
    %c0_i32_0 = arith.constant 0 : i32
    %c0_i32_1 = arith.constant 0 : i32
    return %c0_i32, %c0_i32_0 : i32, i32
  }
  func.func @transform_5(%arg0: i32) -> (i32, i32) {
    %c0_i32 = arith.constant 0 : i32
    %c0_i32_0 = arith.constant 0 : i32
    %c0_i32_1 = arith.constant 0 : i32
    return %c0_i32, %c0_i32_0 : i32, i32
  }
  func.func @transform_6(%arg0: i32) -> (i32, i32) {
    %c0_i32 = arith.constant 0 : i32
    %c0_i32_0 = arith.constant 0 : i32
    %c0_i32_1 = arith.constant 0 : i32
    return %c0_i32, %c0_i32_0 : i32, i32
  }
  func.func @transform_7(%arg0: i32) -> (i32, i32) {
    %c0_i32 = arith.constant 0 : i32
    %c0_i32_0 = arith.constant 0 : i32
    %c0_i32_1 = arith.constant 0 : i32
    return %c0_i32, %c0_i32_0 : i32, i32
  }
  func.func @transform_8(%arg0: i32) -> (i32, i32) {
    %c0_i32 = arith.constant 0 : i32
    %c0_i32_0 = arith.constant 0 : i32
    %c0_i32_1 = arith.constant 0 : i32
    return %c0_i32, %c0_i32_0 : i32, i32
  }
  func.func @transform_9(%arg0: i32) -> (i32, i32) {
    %c0_i32 = arith.constant 0 : i32
    %c0_i32_0 = arith.constant 0 : i32
    %c0_i32_1 = arith.constant 0 : i32
    return %c0_i32, %c0_i32_0 : i32, i32
  }
  func.func @transform_10(%arg0: i32) -> (i32, i32) {
    %c0_i32 = arith.constant 0 : i32
    %c0_i32_0 = arith.constant 0 : i32
    %c0_i32_1 = arith.constant 0 : i32
    return %c0_i32, %c0_i32_0 : i32, i32
  }
  func.func @transform_11(%arg0: i32) -> (i32, i32) {
    %c0_i32 = arith.constant 0 : i32
    %c0_i32_0 = arith.constant 0 : i32
    %c0_i32_1 = arith.constant 0 : i32
    return %c0_i32, %c0_i32_0 : i32, i32
  }
  func.func @transform_12(%arg0: i32) -> (i32, i32) {
    %c0_i32 = arith.constant 0 : i32
    %c0_i32_0 = arith.constant 0 : i32
    return %arg0, %c0_i32 : i32, i32
  }
}

</mosaic_0001>

<llo_original>
// kernel: tpu_custom_call.1
$region0: #{tpu_custom_call.1}
  #allocation0 [shape = 'u32[]', space=smem, size = 0x4, offset = 0x4, fixed_abs, tag = 'smem constant byte address 0x4 - core index']
  #allocation1 [shape = 'u32[144,128]{1,0:T(1,128)}', space=vmem, size = 0x12000, scoped, tag = 'internal scratch']
  %s0 = inlined_call_operand.vmem [shape: bf16[16,1024], index: 0, kind: input, shape index: {}]
  %s1 = inlined_call_operand.vmem [shape: bf16[16,32], index: 1, kind: input, shape index: {}]
  %s2 = inlined_call_operand.hbm [shape: bf16[1024,256], index: 2, kind: input, shape index: {}]
  %s3 = inlined_call_operand.vmem [shape: bf16[256,192], index: 3, kind: input, shape index: {}]
  %s4 = inlined_call_operand.vmem [shape: bf16[192,128], index: 4, kind: input, shape index: {}]
  %s5 = inlined_call_operand.vmem [shape: bf16[128,64], index: 5, kind: input, shape index: {}]
  %s6 = inlined_call_operand.vmem [shape: bf16[64,32], index: 6, kind: input, shape index: {}]
  %s7 = inlined_call_operand.vmem [shape: bf16[32,32], index: 7, kind: input, shape index: {}]
  %s8 = inlined_call_operand.vmem [shape: bf16[32,32], index: 8, kind: input, shape index: {}]
  %s9 = inlined_call_operand.vmem [shape: bf16[32,64], index: 9, kind: input, shape index: {}]
  %s10 = inlined_call_operand.vmem [shape: bf16[160,128], index: 10, kind: input, shape index: {}]
  %s11 = inlined_call_operand.vmem [shape: f32[10,256], index: 11, kind: input, shape index: {}]
  %s12 = inlined_call_operand.hbm [shape: bf16[16,128], index: 12, kind: output, shape index: {}]
  %s13 = sld [smem:[#allocation0]]
  $region62: #{tpu_custom_call.1} parent=0
    _
  %s15 = ssub.s32 1, %s13
  %s16 = scalar_select 0, %s15, %s13
  $region1: #{tpu_custom_call.1} parent=0
    #allocation2 [shape = 'u8[524288]{0}', space=vmem, size = 0x80000, scoped, tag = 'input window, operand 2, single buffered']
    #allocation3 [shape = 's32[1]{0}', space=sflag, size = 0x4, scoped, tag = 'scoped memory for tpu_custom_call.1']
    #allocation4 [shape = 's32[1]{0}', space=sflag, size = 0x4, scoped, tag = 'scoped memory for tpu_custom_call.1']
    #allocation5 [shape = 'u8[4096]{0}', space=vmem, size = 0x1000, scoped, tag = 'output window, operand 0, single buffered']
    %17 = vsyncpa [#allocation3], 0
    %18 = vsyncpa [#allocation4], 0
    // Predicated region
    $region2: #{tpu_custom_call.1} parent=1 // pred_check
      _
    $region3: #{tpu_custom_call.1} parent=1 // pred_check_branch
      %20 = sbr.rel (0) target = $region5
    $region4: #{tpu_custom_call.1} parent=1 // pred_region
      _
    $region5: #{tpu_custom_call.1} parent=1 // pred_fallthru
      _
    // Predicated region
    $region6: #{tpu_custom_call.1} parent=1 // pred_check
      _
    $region7: #{tpu_custom_call.1} parent=1 // pred_check_branch
      %22 = sbr.rel (0) target = $region9
    $region8: #{tpu_custom_call.1} parent=1 // pred_region
      _
    $region9: #{tpu_custom_call.1} parent=1 // pred_fallthru
      _
    // Predicated region
    $region10: #{tpu_custom_call.1} parent=1 // pred_check
      _
    $region11: #{tpu_custom_call.1} parent=1 // pred_check_branch
      %24 = sbr.rel (0) target = $region13
    $region12: #{tpu_custom_call.1} parent=1 // pred_region
      %s26 = ssub.s32 16384, 16384
      %27 = vsyncadd [#allocation3], %s26
      %s28 = sshll.u32 [#allocation2], 4
      %s29 = int_to_ptr.vmem [resolvable:$true] %s28
      %34 = dma.hbm_to_vmem [thread:$0]  %s2, 16384, %s29, [#allocation3], 128, 128, 8
    $region13: #{tpu_custom_call.1} parent=1 // pred_fallthru
      _
    // Predicated region
    $region14: #{tpu_custom_call.1} parent=1 // pred_check
      _
    $region15: #{tpu_custom_call.1} parent=1 // pred_check_branch
      %36 = sbr.rel (0) target = $region17
    $region16: #{tpu_custom_call.1} parent=1 // pred_region
      _
    $region17: #{tpu_custom_call.1} parent=1 // pred_fallthru
      _
    // Predicated region
    $region18: #{tpu_custom_call.1} parent=1 // pred_check
      _
    $region19: #{tpu_custom_call.1} parent=1 // pred_check_branch
      %38 = sbr.rel (0) target = $region21
    $region20: #{tpu_custom_call.1} parent=1 // pred_region
      _
    $region21: #{tpu_custom_call.1} parent=1 // pred_fallthru
      _
    // Predicated region
    $region22: #{tpu_custom_call.1} parent=1 // pred_check
      _
    $region23: #{tpu_custom_call.1} parent=1 // pred_check_branch
      %40 = sbr.rel (0) target = $region25
    $region24: #{tpu_custom_call.1} parent=1 // pred_region
      _
    $region25: #{tpu_custom_call.1} parent=1 // pred_fallthru
      _
    // Predicated region
    $region26: #{tpu_custom_call.1} parent=1 // pred_check
      _
    $region27: #{tpu_custom_call.1} parent=1 // pred_check_branch
      %42 = sbr.rel (0) target = $region29
    $region28: #{tpu_custom_call.1} parent=1 // pred_region
      _
    $region29: #{tpu_custom_call.1} parent=1 // pred_fallthru
      _
    // Predicated region
    $region30: #{tpu_custom_call.1} parent=1 // pred_check
      _
    $region31: #{tpu_custom_call.1} parent=1 // pred_check_branch
      %44 = sbr.rel (0) target = $region33
    $region32: #{tpu_custom_call.1} parent=1 // pred_region
      _
    $region33: #{tpu_custom_call.1} parent=1 // pred_fallthru
      _
    // Predicated region
    $region34: #{tpu_custom_call.1} parent=1 // pred_check
      _
    $region35: #{tpu_custom_call.1} parent=1 // pred_check_branch
      %46 = sbr.rel (0) target = $region37
    $region36: #{tpu_custom_call.1} parent=1 // pred_region
      _
    $region37: #{tpu_custom_call.1} parent=1 // pred_fallthru
      _
    // Predicated region
    $region38: #{tpu_custom_call.1} parent=1 // pred_check
      _
    $region39: #{tpu_custom_call.1} parent=1 // pred_check_branch
      %48 = sbr.rel (0) target = $region41
    $region40: #{tpu_custom_call.1} parent=1 // pred_region
      _
    $region41: #{tpu_custom_call.1} parent=1 // pred_fallthru
      _
    // Predicated region
    $region42: #{tpu_custom_call.1} parent=1 // pred_check
      _
    $region43: #{tpu_custom_call.1} parent=1 // pred_check_branch
      %50 = sbr.rel (0) target = $region45
    $region44: #{tpu_custom_call.1} parent=1 // pred_region
      _
    $region45: #{tpu_custom_call.1} parent=1 // pred_fallthru
      _
    // Predicated region
    $region46: #{tpu_custom_call.1} parent=1 // pred_check
      _
    $region47: #{tpu_custom_call.1} parent=1 // pred_check_branch
      %52 = sbr.rel (0) target = $region49
    $region48: #{tpu_custom_call.1} parent=1 // pred_region
      _
    $region49: #{tpu_custom_call.1} parent=1 // pred_fallthru
      _
    // Predicated region
    $region50: #{tpu_custom_call.1} parent=1 // pred_check
      _
    $region51: #{tpu_custom_call.1} parent=1 // pred_check_branch
      %54 = sbr.rel (0) target = $region53
    $region52: #{tpu_custom_call.1} parent=1 // pred_region
      %55 = dma.done [#allocation3], 16384
    $region53: #{tpu_custom_call.1} parent=1 // pred_fallthru
      _
    %v57 = vld [vmem:[%s0] sm:$0xff]
    %v58 = vld [vmem:[%s0 + $0x8] sm:$0xff]
    %v59 = vld [vmem:[%s0 + $0x10] sm:$0xff]
    %v60 = vld [vmem:[%s0 + $0x18] sm:$0xff]
    %v61 = vld [vmem:[%s0 + $0x20] sm:$0xff]
    %v62 = vld [vmem:[%s0 + $0x28] sm:$0xff]
    %v63 = vld [vmem:[%s0 + $0x30] sm:$0xff]
    %v64 = vld [vmem:[%s0 + $0x38] sm:$0xff]
    %v65 = vld [vmem:[#allocation2] sm:$0xff]
    %v66 = vld [vmem:[#allocation2 + $0x8] sm:$0xff]
    %v67 = vld [vmem:[#allocation2 + $0x10] sm:$0xff]
    %v68 = vld [vmem:[#allocation2 + $0x18] sm:$0xff]
    %v69 = vld [vmem:[#allocation2 + $0x20] sm:$0xff]
    %v70 = vld [vmem:[#allocation2 + $0x28] sm:$0xff]
    %v71 = vld [vmem:[#allocation2 + $0x30] sm:$0xff]
    %v72 = vld [vmem:[#allocation2 + $0x38] sm:$0xff]
    %v73 = vld [vmem:[#allocation2 + $0x40] sm:$0xff]
    %v74 = vld [vmem:[#allocation2 + $0x48] sm:$0xff]
    %v75 = vld [vmem:[#allocation2 + $0x50] sm:$0xff]
    %v76 = vld [vmem:[#allocation2 + $0x58] sm:$0xff]
    %v77 = vld [vmem:[#allocation2 + $0x60] sm:$0xff]
    %v78 = vld [vmem:[#allocation2 + $0x68] sm:$0xff]
    %v79 = vld [vmem:[#allocation2 + $0x70] sm:$0xff]
    %v80 = vld [vmem:[#allocation2 + $0x78] sm:$0xff]
    %v81 = vld [vmem:[#allocation2 + $0x80] sm:$0xff]
    %v82 = vld [vmem:[#allocation2 + $0x88] sm:$0xff]
    %v83 = vld [vmem:[#allocation2 + $0x90] sm:$0xff]
    %v84 = vld [vmem:[#allocation2 + $0x98] sm:$0xff]
    %v85 = vld [vmem:[#allocation2 + $0xa0] sm:$0xff]
    %v86 = vld [vmem:[#allocation2 + $0xa8] sm:$0xff]
    %v87 = vld [vmem:[#allocation2 + $0xb0] sm:$0xff]
    %v88 = vld [vmem:[#allocation2 + $0xb8] sm:$0xff]
    %v89 = vld [vmem:[#allocation2 + $0xc0] sm:$0xff]
    %v90 = vld [vmem:[#allocation2 + $0xc8] sm:$0xff]
    %v91 = vld [vmem:[#allocation2 + $0xd0] sm:$0xff]
    %v92 = vld [vmem:[#allocation2 + $0xd8] sm:$0xff]
    %v93 = vld [vmem:[#allocation2 + $0xe0] sm:$0xff]
    %v94 = vld [vmem:[#allocation2 + $0xe8] sm:$0xff]
    %v95 = vld [vmem:[#allocation2 + $0xf0] sm:$0xff]
    %v96 = vld [vmem:[#allocation2 + $0xf8] sm:$0xff]
    %v97 = vld [vmem:[#allocation2 + $0x100] sm:$0xff]
    %v98 = vld [vmem:[#allocation2 + $0x108] sm:$0xff]
    %v99 = vld [vmem:[#allocation2 + $0x110] sm:$0xff]
    %v100 = vld [vmem:[#allocation2 + $0x118] sm:$0xff]
    %v101 = vld [vmem:[#allocation2 + $0x120] sm:$0xff]
    %v102 = vld [vmem:[#allocation2 + $0x128] sm:$0xff]
    %v103 = vld [vmem:[#allocation2 + $0x130] sm:$0xff]
    %v104 = vld [vmem:[#allocation2 + $0x138] sm:$0xff]
    %v105 = vld [vmem:[#allocation2 + $0x140] sm:$0xff]
    %v106 = vld [vmem:[#allocation2 + $0x148] sm:$0xff]
    %v107 = vld [vmem:[#allocation2 + $0x150] sm:$0xff]
    %v108 = vld [vmem:[#allocation2 + $0x158] sm:$0xff]
    %v109 = vld [vmem:[#allocation2 + $0x160] sm:$0xff]
    %v110 = vld [vmem:[#allocation2 + $0x168] sm:$0xff]
    %v111 = vld [vmem:[#allocation2 + $0x170] sm:$0xff]
    %v112 = vld [vmem:[#allocation2 + $0x178] sm:$0xff]
    %v113 = vld [vmem:[#allocation2 + $0x180] sm:$0xff]
    %v114 = vld [vmem:[#allocation2 + $0x188] sm:$0xff]
    %v115 = vld [vmem:[#allocation2 + $0x190] sm:$0xff]
    %v116 = vld [vmem:[#allocation2 + $0x198] sm:$0xff]
    %v117 = vld [vmem:[#allocation2 + $0x1a0] sm:$0xff]
    %v118 = vld [vmem:[#allocation2 + $0x1a8] sm:$0xff]
    %v119 = vld [vmem:[#allocation2 + $0x1b0] sm:$0xff]
    %v120 = vld [vmem:[#allocation2 + $0x1b8] sm:$0xff]
    %v121 = vld [vmem:[#allocation2 + $0x1c0] sm:$0xff]
    %v122 = vld [vmem:[#allocation2 + $0x1c8] sm:$0xff]
    %v123 = vld [vmem:[#allocation2 + $0x1d0] sm:$0xff]
    %v124 = vld [vmem:[#allocation2 + $0x1d8] sm:$0xff]
    %v125 = vld [vmem:[#allocation2 + $0x1e0] sm:$0xff]
    %v126 = vld [vmem:[#allocation2 + $0x1e8] sm:$0xff]
    %v127 = vld [vmem:[#allocation2 + $0x1f0] sm:$0xff]
    %v128 = vld [vmem:[#allocation2 + $0x1f8] sm:$0xff]
    %v129 = vld [vmem:[#allocation2 + $0x200] sm:$0xff]
    %v130 = vld [vmem:[#allocation2 + $0x208] sm:$0xff]
    %v131 = vld [vmem:[#allocation2 + $0x210] sm:$0xff]
    %v132 = vld [vmem:[#allocation2 + $0x218] sm:$0xff]
    %v133 = vld [vmem:[#allocation2 + $0x220] sm:$0xff]
    %v134 = vld [vmem:[#allocation2 + $0x228] sm:$0xff]
    %v135 = vld [vmem:[#allocation2 + $0x230] sm:$0xff]
    %v136 = vld [vmem:[#allocation2 + $0x238] sm:$0xff]
    %v137 = vld [vmem:[#allocation2 + $0x240] sm:$0xff]
    %v138 = vld [vmem:[#allocation2 + $0x248] sm:$0xff]
    %v139 = vld [vmem:[#allocation2 + $0x250] sm:$0xff]
    %v140 = vld [vmem:[#allocation2 + $0x258] sm:$0xff]
    %v141 = vld [vmem:[#allocation2 + $0x260] sm:$0xff]
    %v142 = vld [vmem:[#allocation2 + $0x268] sm:$0xff]
    %v143 = vld [vmem:[#allocation2 + $0x270] sm:$0xff]
    %v144 = vld [vmem:[#allocation2 + $0x278] sm:$0xff]
    %v145 = vld [vmem:[#allocation2 + $0x280] sm:$0xff]
    %v146 = vld [vmem:[#allocation2 + $0x288] sm:$0xff]
    %v147 = vld [vmem:[#allocation2 + $0x290] sm:$0xff]
    %v148 = vld [vmem:[#allocation2 + $0x298] sm:$0xff]
    %v149 = vld [vmem:[#allocation2 + $0x2a0] sm:$0xff]
    %v150 = vld [vmem:[#allocation2 + $0x2a8] sm:$0xff]
    %v151 = vld [vmem:[#allocation2 + $0x2b0] sm:$0xff]
    %v152 = vld [vmem:[#allocation2 + $0x2b8] sm:$0xff]
    %v153 = vld [vmem:[#allocation2 + $0x2c0] sm:$0xff]
    %v154 = vld [vmem:[#allocation2 + $0x2c8] sm:$0xff]
    %v155 = vld [vmem:[#allocation2 + $0x2d0] sm:$0xff]
    %v156 = vld [vmem:[#allocation2 + $0x2d8] sm:$0xff]
    %v157 = vld [vmem:[#allocation2 + $0x2e0] sm:$0xff]
    %v158 = vld [vmem:[#allocation2 + $0x2e8] sm:$0xff]
    %v159 = vld [vmem:[#allocation2 + $0x2f0] sm:$0xff]
    %v160 = vld [vmem:[#allocation2 + $0x2f8] sm:$0xff]
    %v161 = vld [vmem:[#allocation2 + $0x300] sm:$0xff]
    %v162 = vld [vmem:[#allocation2 + $0x308] sm:$0xff]
    %v163 = vld [vmem:[#allocation2 + $0x310] sm:$0xff]
    %v164 = vld [vmem:[#allocation2 + $0x318] sm:$0xff]
    %v165 = vld [vmem:[#allocation2 + $0x320] sm:$0xff]
    %v166 = vld [vmem:[#allocation2 + $0x328] sm:$0xff]
    %v167 = vld [vmem:[#allocation2 + $0x330] sm:$0xff]
    %v168 = vld [vmem:[#allocation2 + $0x338] sm:$0xff]
    %v169 = vld [vmem:[#allocation2 + $0x340] sm:$0xff]
    %v170 = vld [vmem:[#allocation2 + $0x348] sm:$0xff]
    %v171 = vld [vmem:[#allocation2 + $0x350] sm:$0xff]
    %v172 = vld [vmem:[#allocation2 + $0x358] sm:$0xff]
    %v173 = vld [vmem:[#allocation2 + $0x360] sm:$0xff]
    %v174 = vld [vmem:[#allocation2 + $0x368] sm:$0xff]
    %v175 = vld [vmem:[#allocation2 + $0x370] sm:$0xff]
    %v176 = vld [vmem:[#allocation2 + $0x378] sm:$0xff]
    %v177 = vld [vmem:[#allocation2 + $0x380] sm:$0xff]
    %v178 = vld [vmem:[#allocation2 + $0x388] sm:$0xff]
    %v179 = vld [vmem:[#allocation2 + $0x390] sm:$0xff]
    %v180 = vld [vmem:[#allocation2 + $0x398] sm:$0xff]
    %v181 = vld [vmem:[#allocation2 + $0x3a0] sm:$0xff]
    %v182 = vld [vmem:[#allocation2 + $0x3a8] sm:$0xff]
    %v183 = vld [vmem:[#allocation2 + $0x3b0] sm:$0xff]
    %v184 = vld [vmem:[#allocation2 + $0x3b8] sm:$0xff]
    %v185 = vld [vmem:[#allocation2 + $0x3c0] sm:$0xff]
    %v186 = vld [vmem:[#allocation2 + $0x3c8] sm:$0xff]
    %v187 = vld [vmem:[#allocation2 + $0x3d0] sm:$0xff]
    %v188 = vld [vmem:[#allocation2 + $0x3d8] sm:$0xff]
    %v189 = vld [vmem:[#allocation2 + $0x3e0] sm:$0xff]
    %v190 = vld [vmem:[#allocation2 + $0x3e8] sm:$0xff]
    %v191 = vld [vmem:[#allocation2 + $0x3f0] sm:$0xff]
    %v192 = vld [vmem:[#allocation2 + $0x3f8] sm:$0xff]
    %v193 = vld [vmem:[%s11] ss:$8 sm:$0x3]
    %v195 = vlaneseq
    %v196 = vshrl.u32 %v195, 7
    %v197 = vsub.s32 0, %v196
    %v198 = vrot.slane %v193, %v197
    %v199 = vlaneseq
    %v200 = vshrl.u32 %v199, 7
    %v201 = vsub.s32 1, %v200
    %v202 = vrot.slane %v193, %v201
    %v213 = vunpack.c.l.b16 %v57
    %v214 = vunpack.c.h.b16 %v57
    %v215 = vunpack.c.l.b16 %v58
    %v216 = vunpack.c.h.b16 %v58
    %v217 = vunpack.c.l.b16 %v59
    %v218 = vunpack.c.h.b16 %v59
    %v219 = vunpack.c.l.b16 %v60
    %v220 = vunpack.c.h.b16 %v60
    %v221 = vunpack.c.l.b16 %v61
    %v222 = vunpack.c.h.b16 %v61
    %v223 = vunpack.c.l.b16 %v62
    %v224 = vunpack.c.h.b16 %v62
    %v225 = vunpack.c.l.b16 %v63
    %v226 = vunpack.c.h.b16 %v63
    %v227 = vunpack.c.l.b16 %v64
    %v228 = vunpack.c.h.b16 %v64
    %v229 = vpack.c.b16 %v221, %v213
    %v230 = vpack.c.b16 %v222, %v214
    %v231 = vpack.c.b16 %v223, %v215
    %v232 = vpack.c.b16 %v224, %v216
    %v233 = vpack.c.b16 %v225, %v217
    %v234 = vpack.c.b16 %v226, %v218
    %v235 = vpack.c.b16 %v227, %v219
    %v236 = vpack.c.b16 %v228, %v220
    %v373 = vunpack.c.l.b16 %v65
    %v374 = vunpack.c.h.b16 %v65
    %v375 = vunpack.c.l.b16 %v66
    %v376 = vunpack.c.h.b16 %v66
    %v377 = vunpack.c.l.b16 %v67
    %v378 = vunpack.c.h.b16 %v67
    %v379 = vunpack.c.l.b16 %v68
    %v380 = vunpack.c.h.b16 %v68
    %v381 = vunpack.c.l.b16 %v69
    %v382 = vunpack.c.h.b16 %v69
    %v383 = vunpack.c.l.b16 %v70
    %v384 = vunpack.c.h.b16 %v70
    %v385 = vunpack.c.l.b16 %v71
    %v386 = vunpack.c.h.b16 %v71
    %v387 = vunpack.c.l.b16 %v72
    %v388 = vunpack.c.h.b16 %v72
    %v389 = vunpack.c.l.b16 %v73
    %v390 = vunpack.c.h.b16 %v73
    %v391 = vunpack.c.l.b16 %v74
    %v392 = vunpack.c.h.b16 %v74
    %v393 = vunpack.c.l.b16 %v75
    %v394 = vunpack.c.h.b16 %v75
    %v395 = vunpack.c.l.b16 %v76
    %v396 = vunpack.c.h.b16 %v76
    %v397 = vunpack.c.l.b16 %v77
    %v398 = vunpack.c.h.b16 %v77
    %v399 = vunpack.c.l.b16 %v78
    %v400 = vunpack.c.h.b16 %v78
    %v401 = vunpack.c.l.b16 %v79
    %v402 = vunpack.c.h.b16 %v79
    %v403 = vunpack.c.l.b16 %v80
    %v404 = vunpack.c.h.b16 %v80
    %v405 = vunpack.c.l.b16 %v81
    %v406 = vunpack.c.h.b16 %v81
    %v407 = vunpack.c.l.b16 %v82
    %v408 = vunpack.c.h.b16 %v82
    %v409 = vunpack.c.l.b16 %v83
    %v410 = vunpack.c.h.b16 %v83
    %v411 = vunpack.c.l.b16 %v84
    %v412 = vunpack.c.h.b16 %v84
    %v413 = vunpack.c.l.b16 %v85
    %v414 = vunpack.c.h.b16 %v85
    %v415 = vunpack.c.l.b16 %v86
    %v416 = vunpack.c.h.b16 %v86
    %v417 = vunpack.c.l.b16 %v87
    %v418 = vunpack.c.h.b16 %v87
    %v419 = vunpack.c.l.b16 %v88
    %v420 = vunpack.c.h.b16 %v88
    %v421 = vunpack.c.l.b16 %v89
    %v422 = vunpack.c.h.b16 %v89
    %v423 = vunpack.c.l.b16 %v90
    %v424 = vunpack.c.h.b16 %v90
    %v425 = vunpack.c.l.b16 %v91
    %v426 = vunpack.c.h.b16 %v91
    %v427 = vunpack.c.l.b16 %v92
    %v428 = vunpack.c.h.b16 %v92
    %v429 = vunpack.c.l.b16 %v93
    %v430 = vunpack.c.h.b16 %v93
    %v431 = vunpack.c.l.b16 %v94
    %v432 = vunpack.c.h.b16 %v94
    %v433 = vunpack.c.l.b16 %v95
    %v434 = vunpack.c.h.b16 %v95
    %v435 = vunpack.c.l.b16 %v96
    %v436 = vunpack.c.h.b16 %v96
    %v437 = vunpack.c.l.b16 %v97
    %v438 = vunpack.c.h.b16 %v97
    %v439 = vunpack.c.l.b16 %v98
    %v440 = vunpack.c.h.b16 %v98
    %v441 = vunpack.c.l.b16 %v99
    %v442 = vunpack.c.h.b16 %v99
    %v443 = vunpack.c.l.b16 %v100
    %v444 = vunpack.c.h.b16 %v100
    %v445 = vunpack.c.l.b16 %v101
    %v446 = vunpack.c.h.b16 %v101
    %v447 = vunpack.c.l.b16 %v102
    %v448 = vunpack.c.h.b16 %v102
    %v449 = vunpack.c.l.b16 %v103
    %v450 = vunpack.c.h.b16 %v103
    %v451 = vunpack.c.l.b16 %v104
    %v452 = vunpack.c.h.b16 %v104
    %v453 = vunpack.c.l.b16 %v105
    %v454 = vunpack.c.h.b16 %v105
    %v455 = vunpack.c.l.b16 %v106
    %v456 = vunpack.c.h.b16 %v106
    %v457 = vunpack.c.l.b16 %v107
    %v458 = vunpack.c.h.b16 %v107
    %v459 = vunpack.c.l.b16 %v108
    %v460 = vunpack.c.h.b16 %v108
    %v461 = vunpack.c.l.b16 %v109
    %v462 = vunpack.c.h.b16 %v109
    %v463 = vunpack.c.l.b16 %v110
    %v464 = vunpack.c.h.b16 %v110
    %v465 = vunpack.c.l.b16 %v111
    %v466 = vunpack.c.h.b16 %v111
    %v467 = vunpack.c.l.b16 %v112
    %v468 = vunpack.c.h.b16 %v112
    %v469 = vunpack.c.l.b16 %v113
    %v470 = vunpack.c.h.b16 %v113
    %v471 = vunpack.c.l.b16 %v114
    %v472 = vunpack.c.h.b16 %v114
    %v473 = vunpack.c.l.b16 %v115
    %v474 = vunpack.c.h.b16 %v115
    %v475 = vunpack.c.l.b16 %v116
    %v476 = vunpack.c.h.b16 %v116
    %v477 = vunpack.c.l.b16 %v117
    %v478 = vunpack.c.h.b16 %v117
    %v479 = vunpack.c.l.b16 %v118
    %v480 = vunpack.c.h.b16 %v118
    %v481 = vunpack.c.l.b16 %v119
    %v482 = vunpack.c.h.b16 %v119
    %v483 = vunpack.c.l.b16 %v120
    %v484 = vunpack.c.h.b16 %v120
    %v485 = vunpack.c.l.b16 %v121
    %v486 = vunpack.c.h.b16 %v121
    %v487 = vunpack.c.l.b16 %v122
    %v488 = vunpack.c.h.b16 %v122
    %v489 = vunpack.c.l.b16 %v123
    %v490 = vunpack.c.h.b16 %v123
    %v491 = vunpack.c.l.b16 %v124
    %v492 = vunpack.c.h.b16 %v124
    %v493 = vunpack.c.l.b16 %v125
    %v494 = vunpack.c.h.b16 %v125
    %v495 = vunpack.c.l.b16 %v126
    %v496 = vunpack.c.h.b16 %v126
    %v497 = vunpack.c.l.b16 %v127
    %v498 = vunpack.c.h.b16 %v127
    %v499 = vunpack.c.l.b16 %v128
    %v500 = vunpack.c.h.b16 %v128
    %v501 = vunpack.c.l.b16 %v129
    %v502 = vunpack.c.h.b16 %v129
    %v503 = vunpack.c.l.b16 %v130
    %v504 = vunpack.c.h.b16 %v130
    %v505 = vunpack.c.l.b16 %v131
    %v506 = vunpack.c.h.b16 %v131
    %v507 = vunpack.c.l.b16 %v132
    %v508 = vunpack.c.h.b16 %v132
    %v509 = vunpack.c.l.b16 %v133
    %v510 = vunpack.c.h.b16 %v133
    %v511 = vunpack.c.l.b16 %v134
    %v512 = vunpack.c.h.b16 %v134
    %v513 = vunpack.c.l.b16 %v135
    %v514 = vunpack.c.h.b16 %v135
    %v515 = vunpack.c.l.b16 %v136
    %v516 = vunpack.c.h.b16 %v136
    %v517 = vunpack.c.l.b16 %v137
    %v518 = vunpack.c.h.b16 %v137
    %v519 = vunpack.c.l.b16 %v138
    %v520 = vunpack.c.h.b16 %v138
    %v521 = vunpack.c.l.b16 %v139
    %v522 = vunpack.c.h.b16 %v139
    %v523 = vunpack.c.l.b16 %v140
    %v524 = vunpack.c.h.b16 %v140
    %v525 = vunpack.c.l.b16 %v141
    %v526 = vunpack.c.h.b16 %v141
    %v527 = vunpack.c.l.b16 %v142
    %v528 = vunpack.c.h.b16 %v142
    %v529 = vunpack.c.l.b16 %v143
    %v530 = vunpack.c.h.b16 %v143
    %v531 = vunpack.c.l.b16 %v144
    %v532 = vunpack.c.h.b16 %v144
    %v533 = vunpack.c.l.b16 %v145
    %v534 = vunpack.c.h.b16 %v145
    %v535 = vunpack.c.l.b16 %v146
    %v536 = vunpack.c.h.b16 %v146
    %v537 = vunpack.c.l.b16 %v147
    %v538 = vunpack.c.h.b16 %v147
    %v539 = vunpack.c.l.b16 %v148
    %v540 = vunpack.c.h.b16 %v148
    %v541 = vunpack.c.l.b16 %v149
    %v542 = vunpack.c.h.b16 %v149
    %v543 = vunpack.c.l.b16 %v150
    %v544 = vunpack.c.h.b16 %v150
    %v545 = vunpack.c.l.b16 %v151
    %v546 = vunpack.c.h.b16 %v151
    %v547 = vunpack.c.l.b16 %v152
    %v548 = vunpack.c.h.b16 %v152
    %v549 = vunpack.c.l.b16 %v153
    %v550 = vunpack.c.h.b16 %v153
    %v551 = vunpack.c.l.b16 %v154
    %v552 = vunpack.c.h.b16 %v154
    %v553 = vunpack.c.l.b16 %v155
    %v554 = vunpack.c.h.b16 %v155
    %v555 = vunpack.c.l.b16 %v156
    %v556 = vunpack.c.h.b16 %v156
    %v557 = vunpack.c.l.b16 %v157
    %v558 = vunpack.c.h.b16 %v157
    %v559 = vunpack.c.l.b16 %v158
    %v560 = vunpack.c.h.b16 %v158
    %v561 = vunpack.c.l.b16 %v159
    %v562 = vunpack.c.h.b16 %v159
    %v563 = vunpack.c.l.b16 %v160
    %v564 = vunpack.c.h.b16 %v160
    %v565 = vunpack.c.l.b16 %v161
    %v566 = vunpack.c.h.b16 %v161
    %v567 = vunpack.c.l.b16 %v162
    %v568 = vunpack.c.h.b16 %v162
    %v569 = vunpack.c.l.b16 %v163
    %v570 = vunpack.c.h.b16 %v163
    %v571 = vunpack.c.l.b16 %v164
    %v572 = vunpack.c.h.b16 %v164
    %v573 = vunpack.c.l.b16 %v165
    %v574 = vunpack.c.h.b16 %v165
    %v575 = vunpack.c.l.b16 %v166
    %v576 = vunpack.c.h.b16 %v166
    %v577 = vunpack.c.l.b16 %v167
    %v578 = vunpack.c.h.b16 %v167
    %v579 = vunpack.c.l.b16 %v168
    %v580 = vunpack.c.h.b16 %v168
    %v581 = vunpack.c.l.b16 %v169
    %v582 = vunpack.c.h.b16 %v169
    %v583 = vunpack.c.l.b16 %v170
    %v584 = vunpack.c.h.b16 %v170
    %v585 = vunpack.c.l.b16 %v171
    %v586 = vunpack.c.h.b16 %v171
    %v587 = vunpack.c.l.b16 %v172
    %v588 = vunpack.c.h.b16 %v172
    %v589 = vunpack.c.l.b16 %v173
    %v590 = vunpack.c.h.b16 %v173
    %v591 = vunpack.c.l.b16 %v174
    %v592 = vunpack.c.h.b16 %v174
    %v593 = vunpack.c.l.b16 %v175
    %v594 = vunpack.c.h.b16 %v175
    %v595 = vunpack.c.l.b16 %v176
    %v596 = vunpack.c.h.b16 %v176
    %v597 = vunpack.c.l.b16 %v177
    %v598 = vunpack.c.h.b16 %v177
    %v599 = vunpack.c.l.b16 %v178
    %v600 = vunpack.c.h.b16 %v178
    %v601 = vunpack.c.l.b16 %v179
    %v602 = vunpack.c.h.b16 %v179
    %v603 = vunpack.c.l.b16 %v180
    %v604 = vunpack.c.h.b16 %v180
    %v605 = vunpack.c.l.b16 %v181
    %v606 = vunpack.c.h.b16 %v181
    %v607 = vunpack.c.l.b16 %v182
    %v608 = vunpack.c.h.b16 %v182
    %v609 = vunpack.c.l.b16 %v183
    %v610 = vunpack.c.h.b16 %v183
    %v611 = vunpack.c.l.b16 %v184
    %v612 = vunpack.c.h.b16 %v184
    %v613 = vunpack.c.l.b16 %v185
    %v614 = vunpack.c.h.b16 %v185
    %v615 = vunpack.c.l.b16 %v186
    %v616 = vunpack.c.h.b16 %v186
    %v617 = vunpack.c.l.b16 %v187
    %v618 = vunpack.c.h.b16 %v187
    %v619 = vunpack.c.l.b16 %v188
    %v620 = vunpack.c.h.b16 %v188
    %v621 = vunpack.c.l.b16 %v189
    %v622 = vunpack.c.h.b16 %v189
    %v623 = vunpack.c.l.b16 %v190
    %v624 = vunpack.c.h.b16 %v190
    %v625 = vunpack.c.l.b16 %v191
    %v626 = vunpack.c.h.b16 %v191
    %v627 = vunpack.c.l.b16 %v192
    %v628 = vunpack.c.h.b16 %v192
    %v629 = vpack.c.b16 %v375, %v373
    %v630 = vpack.c.b16 %v376, %v374
    %v631 = vpack.c.b16 %v379, %v377
    %v632 = vpack.c.b16 %v380, %v378
    %v633 = vpack.c.b16 %v383, %v381
    %v634 = vpack.c.b16 %v384, %v382
    %v635 = vpack.c.b16 %v387, %v385
    %v636 = vpack.c.b16 %v388, %v386
    %v637 = vpack.c.b16 %v391, %v389
    %v638 = vpack.c.b16 %v392, %v390
    %v639 = vpack.c.b16 %v395, %v393
    %v640 = vpack.c.b16 %v396, %v394
    %v641 = vpack.c.b16 %v399, %v397
    %v642 = vpack.c.b16 %v400, %v398
    %v643 = vpack.c.b16 %v403, %v401
    %v644 = vpack.c.b16 %v404, %v402
    %v645 = vpack.c.b16 %v407, %v405
    %v646 = vpack.c.b16 %v408, %v406
    %v647 = vpack.c.b16 %v411, %v409
    %v648 = vpack.c.b16 %v412, %v410
    %v649 = vpack.c.b16 %v415, %v413
    %v650 = vpack.c.b16 %v416, %v414
    %v651 = vpack.c.b16 %v419, %v417
    %v652 = vpack.c.b16 %v420, %v418
    %v653 = vpack.c.b16 %v423, %v421
    %v654 = vpack.c.b16 %v424, %v422
    %v655 = vpack.c.b16 %v427, %v425
    %v656 = vpack.c.b16 %v428, %v426
    %v657 = vpack.c.b16 %v431, %v429
    %v658 = vpack.c.b16 %v432, %v430
    %v659 = vpack.c.b16 %v435, %v433
    %v660 = vpack.c.b16 %v436, %v434
    %v661 = vpack.c.b16 %v439, %v437
    %v662 = vpack.c.b16 %v440, %v438
    %v663 = vpack.c.b16 %v443, %v441
    %v664 = vpack.c.b16 %v444, %v442
    %v665 = vpack.c.b16 %v447, %v445
    %v666 = vpack.c.b16 %v448, %v446
    %v667 = vpack.c.b16 %v451, %v449
    %v668 = vpack.c.b16 %v452, %v450
    %v669 = vpack.c.b16 %v455, %v453
    %v670 = vpack.c.b16 %v456, %v454
    %v671 = vpack.c.b16 %v459, %v457
    %v672 = vpack.c.b16 %v460, %v458
    %v673 = vpack.c.b16 %v463, %v461
    %v674 = vpack.c.b16 %v464, %v462
    %v675 = vpack.c.b16 %v467, %v465
    %v676 = vpack.c.b16 %v468, %v466
    %v677 = vpack.c.b16 %v471, %v469
    %v678 = vpack.c.b16 %v472, %v470
    %v679 = vpack.c.b16 %v475, %v473
    %v680 = vpack.c.b16 %v476, %v474
    %v681 = vpack.c.b16 %v479, %v477
    %v682 = vpack.c.b16 %v480, %v478
    %v683 = vpack.c.b16 %v483, %v481
    %v684 = vpack.c.b16 %v484, %v482
    %v685 = vpack.c.b16 %v487, %v485
    %v686 = vpack.c.b16 %v488, %v486
    %v687 = vpack.c.b16 %v491, %v489
    %v688 = vpack.c.b16 %v492, %v490
    %v689 = vpack.c.b16 %v495, %v493
    %v690 = vpack.c.b16 %v496, %v494
    %v691 = vpack.c.b16 %v499, %v497
    %v692 = vpack.c.b16 %v500, %v498
    %v693 = vpack.c.b16 %v503, %v501
    %v694 = vpack.c.b16 %v504, %v502
    %v695 = vpack.c.b16 %v507, %v505
    %v696 = vpack.c.b16 %v508, %v506
    %v697 = vpack.c.b16 %v511, %v509
    %v698 = vpack.c.b16 %v512, %v510
    %v699 = vpack.c.b16 %v515, %v513
    %v700 = vpack.c.b16 %v516, %v514
    %v701 = vpack.c.b16 %v519, %v517
    %v702 = vpack.c.b16 %v520, %v518
    %v703 = vpack.c.b16 %v523, %v521
    %v704 = vpack.c.b16 %v524, %v522
    %v705 = vpack.c.b16 %v527, %v525
    %v706 = vpack.c.b16 %v528, %v526
    %v707 = vpack.c.b16 %v531, %v529
    %v708 = vpack.c.b16 %v532, %v530
    %v709 = vpack.c.b16 %v535, %v533
    %v710 = vpack.c.b16 %v536, %v534
    %v711 = vpack.c.b16 %v539, %v537
    %v712 = vpack.c.b16 %v540, %v538
    %v713 = vpack.c.b16 %v543, %v541
    %v714 = vpack.c.b16 %v544, %v542
    %v715 = vpack.c.b16 %v547, %v545
    %v716 = vpack.c.b16 %v548, %v546
    %v717 = vpack.c.b16 %v551, %v549
    %v718 = vpack.c.b16 %v552, %v550
    %v719 = vpack.c.b16 %v555, %v553
    %v720 = vpack.c.b16 %v556, %v554
    %v721 = vpack.c.b16 %v559, %v557
    %v722 = vpack.c.b16 %v560, %v558
    %v723 = vpack.c.b16 %v563, %v561
    %v724 = vpack.c.b16 %v564, %v562
    %v725 = vpack.c.b16 %v567, %v565
    %v726 = vpack.c.b16 %v568, %v566
    %v727 = vpack.c.b16 %v571, %v569
    %v728 = vpack.c.b16 %v572, %v570
    %v729 = vpack.c.b16 %v575, %v573
    %v730 = vpack.c.b16 %v576, %v574
    %v731 = vpack.c.b16 %v579, %v577
    %v732 = vpack.c.b16 %v580, %v578
    %v733 = vpack.c.b16 %v583, %v581
    %v734 = vpack.c.b16 %v584, %v582
    %v735 = vpack.c.b16 %v587, %v585
    %v736 = vpack.c.b16 %v588, %v586
    %v737 = vpack.c.b16 %v591, %v589
    %v738 = vpack.c.b16 %v592, %v590
    %v739 = vpack.c.b16 %v595, %v593
    %v740 = vpack.c.b16 %v596, %v594
    %v741 = vpack.c.b16 %v599, %v597
    %v742 = vpack.c.b16 %v600, %v598
    %v743 = vpack.c.b16 %v603, %v601
    %v744 = vpack.c.b16 %v604, %v602
    %v745 = vpack.c.b16 %v607, %v605
    %v746 = vpack.c.b16 %v608, %v606
    %v747 = vpack.c.b16 %v611, %v609
    %v748 = vpack.c.b16 %v612, %v610
    %v749 = vpack.c.b16 %v615, %v613
    %v750 = vpack.c.b16 %v616, %v614
    %v751 = vpack.c.b16 %v619, %v617
    %v752 = vpack.c.b16 %v620, %v618
    %v753 = vpack.c.b16 %v623, %v621
    %v754 = vpack.c.b16 %v624, %v622
    %v755 = vpack.c.b16 %v627, %v625
    %v756 = vpack.c.b16 %v628, %v626
    %885 = vmatprep.subr.bf16.mxu0 %v644
    %886 = vmatpush1.bf16.msra.mxu0 %v643
    %887 = vmatprep.subr.bf16.mxu0 %v642
    %888 = vmatpush1.bf16.msra.mxu0 %v641
    %889 = vmatprep.subr.bf16.mxu0 %v640
    %890 = vmatpush1.bf16.msra.mxu0 %v639
    %891 = vmatprep.subr.bf16.mxu0 %v638
    %892 = vmatpush1.bf16.msra.mxu0 %v637
    %893 = vmatprep.subr.bf16.mxu0 %v636
    %894 = vmatpush1.bf16.msra.mxu0 %v635
    %895 = vmatprep.subr.bf16.mxu0 %v634
    %896 = vmatpush1.bf16.msra.mxu0 %v633
    %897 = vmatprep.subr.bf16.mxu0 %v632
    %898 = vmatpush1.bf16.msra.mxu0 %v631
    %899 = vmatprep.subr.bf16.mxu0 %v630
    %900 = vmatpush1.bf16.msra.mxu0 %v629
    %901 = vmatprep.subr.bf16.mxu0 %v660
    %902 = vmatpush2.bf16.msra.mxu0 %v659
    %903 = vmatprep.subr.bf16.mxu0 %v658
    %904 = vmatpush2.bf16.msra.mxu0 %v657
    %905 = vmatprep.subr.bf16.mxu0 %v656
    %906 = vmatpush2.bf16.msra.mxu0 %v655
    %907 = vmatprep.subr.bf16.mxu0 %v654
    %908 = vmatpush2.bf16.msra.mxu0 %v653
    %909 = vmatprep.subr.bf16.mxu0 %v652
    %910 = vmatpush2.bf16.msra.mxu0 %v651
    %911 = vmatprep.subr.bf16.mxu0 %v650
    %912 = vmatpush2.bf16.msra.mxu0 %v649
    %913 = vmatprep.subr.bf16.mxu0 %v648
    %914 = vmatpush2.bf16.msra.mxu0 %v647
    %915 = vmatprep.subr.bf16.mxu0 %v646
    %916 = vmatpush2.bf16.msra.mxu0 %v645
    %917 = vmatprep.mubr.bf16.mxu0 %v230
    %918 = vmatmul.mubr.bf16.gmra.mxu0 %v229
    %v919 = vpop.f32.mrf.mxu0
    %v920 = vadd.f32 %v198, %v919
    %v921 = vpop.f32.mrf.mxu0
    %v922 = vadd.f32 %v202, %v921
    %v923 = vpop.f32.mrf.mxu0
    %v924 = vadd.f32 %v198, %v923
    %v925 = vpop.f32.mrf.mxu0
    %v926 = vadd.f32 %v202, %v925
    %927 = vdwg.mxu0
    %928 = vmatprep.subr.bf16.mxu0 %v676
    %929 = vmatpush1.bf16.msra.mxu0 %v675
    %930 = vmatprep.subr.bf16.mxu0 %v674
    %931 = vmatpush1.bf16.msra.mxu0 %v673
    %932 = vmatprep.subr.bf16.mxu0 %v672
    %933 = vmatpush1.bf16.msra.mxu0 %v671
    %934 = vmatprep.subr.bf16.mxu0 %v670
    %935 = vmatpush1.bf16.msra.mxu0 %v669
    %936 = vmatprep.subr.bf16.mxu0 %v668
    %937 = vmatpush1.bf16.msra.mxu0 %v667
    %938 = vmatprep.subr.bf16.mxu0 %v666
    %939 = vmatpush1.bf16.msra.mxu0 %v665
    %940 = vmatprep.subr.bf16.mxu0 %v664
    %941 = vmatpush1.bf16.msra.mxu0 %v663
    %942 = vmatprep.subr.bf16.mxu0 %v662
    %943 = vmatpush1.bf16.msra.mxu0 %v661
    %944 = vmatprep.subr.bf16.mxu0 %v692
    %945 = vmatpush2.bf16.msra.mxu0 %v691
    %946 = vmatprep.subr.bf16.mxu0 %v690
    %947 = vmatpush2.bf16.msra.mxu0 %v689
    %948 = vmatprep.subr.bf16.mxu0 %v688
    %949 = vmatpush2.bf16.msra.mxu0 %v687
    %950 = vmatprep.subr.bf16.mxu0 %v686
    %951 = vmatpush2.bf16.msra.mxu0 %v685
    %952 = vmatprep.subr.bf16.mxu0 %v684
    %953 = vmatpush2.bf16.msra.mxu0 %v683
    %954 = vmatprep.subr.bf16.mxu0 %v682
    %955 = vmatpush2.bf16.msra.mxu0 %v681
    %956 = vmatprep.subr.bf16.mxu0 %v680
    %957 = vmatpush2.bf16.msra.mxu0 %v679
    %958 = vmatprep.subr.bf16.mxu0 %v678
    %959 = vmatpush2.bf16.msra.mxu0 %v677
    %960 = vmatprep.mubr.bf16.mxu0 %v232
    %961 = vmatmul.mubr.bf16.gmra.mxu0 %v231
    %v962 = vpop.f32.mrf.mxu0
    %v963 = vadd.f32 %v920, %v962
    %v964 = vpop.f32.mrf.mxu0
    %v965 = vadd.f32 %v922, %v964
    %v966 = vpop.f32.mrf.mxu0
    %v967 = vadd.f32 %v924, %v966
    %v968 = vpop.f32.mrf.mxu0
    %v969 = vadd.f32 %v926, %v968
    %970 = vdwg.mxu0
    %971 = vmatprep.subr.bf16.mxu0 %v708
    %972 = vmatpush1.bf16.msra.mxu0 %v707
    %973 = vmatprep.subr.bf16.mxu0 %v706
    %974 = vmatpush1.bf16.msra.mxu0 %v705
    %975 = vmatprep.subr.bf16.mxu0 %v704
    %976 = vmatpush1.bf16.msra.mxu0 %v703
    %977 = vmatprep.subr.bf16.mxu0 %v702
    %978 = vmatpush1.bf16.msra.mxu0 %v701
    %979 = vmatprep.subr.bf16.mxu0 %v700
    %980 = vmatpush1.bf16.msra.mxu0 %v699
    %981 = vmatprep.subr.bf16.mxu0 %v698
    %982 = vmatpush1.bf16.msra.mxu0 %v697
    %983 = vmatprep.subr.bf16.mxu0 %v696
    %984 = vmatpush1.bf16.msra.mxu0 %v695
    %985 = vmatprep.subr.bf16.mxu0 %v694
    %986 = vmatpush1.bf16.msra.mxu0 %v693
    %987 = vmatprep.subr.bf16.mxu0 %v724
    %988 = vmatpush2.bf16.msra.mxu0 %v723
    %989 = vmatprep.subr.bf16.mxu0 %v722
    %990 = vmatpush2.bf16.msra.mxu0 %v721
    %991 = vmatprep.subr.bf16.mxu0 %v720
    %992 = vmatpush2.bf16.msra.mxu0 %v719
    %993 = vmatprep.subr.bf16.mxu0 %v718
    %994 = vmatpush2.bf16.msra.mxu0 %v717
    %995 = vmatprep.subr.bf16.mxu0 %v716
    %996 = vmatpush2.bf16.msra.mxu0 %v715
    %997 = vmatprep.subr.bf16.mxu0 %v714
    %998 = vmatpush2.bf16.msra.mxu0 %v713
    %999 = vmatprep.subr.bf16.mxu0 %v712
    %1000 = vmatpush2.bf16.msra.mxu0 %v711
    %1001 = vmatprep.subr.bf16.mxu0 %v710
    %1002 = vmatpush2.bf16.msra.mxu0 %v709
    %1003 = vmatprep.mubr.bf16.mxu0 %v234
    %1004 = vmatmul.mubr.bf16.gmra.mxu0 %v233
    %v1005 = vpop.f32.mrf.mxu0
    %v1006 = vadd.f32 %v963, %v1005
    %v1007 = vpop.f32.mrf.mxu0
    %v1008 = vadd.f32 %v965, %v1007
    %v1009 = vpop.f32.mrf.mxu0
    %v1010 = vadd.f32 %v967, %v1009
    %v1011 = vpop.f32.mrf.mxu0
    %v1012 = vadd.f32 %v969, %v1011
    %1013 = vdwg.mxu0
    %1014 = vmatprep.subr.bf16.mxu0 %v740
    %1015 = vmatpush1.bf16.msra.mxu0 %v739
    %1016 = vmatprep.subr.bf16.mxu0 %v738
    %1017 = vmatpush1.bf16.msra.mxu0 %v737
    %1018 = vmatprep.subr.bf16.mxu0 %v736
    %1019 = vmatpush1.bf16.msra.mxu0 %v735
    %1020 = vmatprep.subr.bf16.mxu0 %v734
    %1021 = vmatpush1.bf16.msra.mxu0 %v733
    %1022 = vmatprep.subr.bf16.mxu0 %v732
    %1023 = vmatpush1.bf16.msra.mxu0 %v731
    %1024 = vmatprep.subr.bf16.mxu0 %v730
    %1025 = vmatpush1.bf16.msra.mxu0 %v729
    %1026 = vmatprep.subr.bf16.mxu0 %v728
    %1027 = vmatpush1.bf16.msra.mxu0 %v727
    %1028 = vmatprep.subr.bf16.mxu0 %v726
    %1029 = vmatpush1.bf16.msra.mxu0 %v725
    %1030 = vmatprep.subr.bf16.mxu0 %v756
    %1031 = vmatpush2.bf16.msra.mxu0 %v755
    %1032 = vmatprep.subr.bf16.mxu0 %v754
    %1033 = vmatpush2.bf16.msra.mxu0 %v753
    %1034 = vmatprep.subr.bf16.mxu0 %v752
    %1035 = vmatpush2.bf16.msra.mxu0 %v751
    %1036 = vmatprep.subr.bf16.mxu0 %v750
    %1037 = vmatpush2.bf16.msra.mxu0 %v749
    %1038 = vmatprep.subr.bf16.mxu0 %v748
    %1039 = vmatpush2.bf16.msra.mxu0 %v747
    %1040 = vmatprep.subr.bf16.mxu0 %v746
    %1041 = vmatpush2.bf16.msra.mxu0 %v745
    %1042 = vmatprep.subr.bf16.mxu0 %v744
    %1043 = vmatpush2.bf16.msra.mxu0 %v743
    %1044 = vmatprep.subr.bf16.mxu0 %v742
    %1045 = vmatpush2.bf16.msra.mxu0 %v741
    %1046 = vmatprep.mubr.bf16.mxu0 %v236
    %1047 = vmatmul.mubr.bf16.gmra.mxu0 %v235
    %v1048 = vpop.f32.mrf.mxu0
    %v1049 = vadd.f32 %v1006, %v1048
    %v1050 = vpop.f32.mrf.mxu0
    %v1051 = vadd.f32 %v1008, %v1050
    %v1052 = vpop.f32.mrf.mxu0
    %v1053 = vadd.f32 %v1010, %v1052
    %v1054 = vpop.f32.mrf.mxu0
    %v1055 = vadd.f32 %v1012, %v1054
    %1056 = vdwg.mxu0
    %vm1057 = vcmp.gt.f32.partialorder %v1049, 0.0
    %vm1058 = vcmp.gt.f32.partialorder %v1051, 0.0
    %vm1059 = vcmp.gt.f32.partialorder %v1053, 0.0
    %vm1060 = vcmp.gt.f32.partialorder %v1055, 0.0
    %v1061 = vmul.f32 %v1049, 0.01
    %v1062 = vmul.f32 %v1051, 0.01
    %v1063 = vmul.f32 %v1053, 0.01
    %v1064 = vmul.f32 %v1055, 0.01
    %v1065 = vsel %vm1057, %v1049, %v1061
    %v1066 = vsel %vm1058, %v1051, %v1062
    %v1067 = vsel %vm1059, %v1053, %v1063
    %v1068 = vsel %vm1060, %v1055, %v1064
    %v1069 = vld [vmem:[%s3] sm:$0xff]
    %v1070 = vld [vmem:[%s3 + $0x8] sm:$0xff]
    %v1071 = vld [vmem:[%s3 + $0x10] sm:$0xff]
    %v1072 = vld [vmem:[%s3 + $0x18] sm:$0xff]
    %v1073 = vld [vmem:[%s3 + $0x20] sm:$0xff]
    %v1074 = vld [vmem:[%s3 + $0x28] sm:$0xff]
    %v1075 = vld [vmem:[%s3 + $0x30] sm:$0xff]
    %v1076 = vld [vmem:[%s3 + $0x38] sm:$0xff]
    %v1077 = vld [vmem:[%s3 + $0x40] sm:$0xff]
    %v1078 = vld [vmem:[%s3 + $0x48] sm:$0xff]
    %v1079 = vld [vmem:[%s3 + $0x50] sm:$0xff]
    %v1080 = vld [vmem:[%s3 + $0x58] sm:$0xff]
    %v1081 = vld [vmem:[%s3 + $0x60] sm:$0xff]
    %v1082 = vld [vmem:[%s3 + $0x68] sm:$0xff]
    %v1083 = vld [vmem:[%s3 + $0x70] sm:$0xff]
    %v1084 = vld [vmem:[%s3 + $0x78] sm:$0xff]
    %v1085 = vld [vmem:[%s3 + $0x80] sm:$0xff]
    %v1086 = vld [vmem:[%s3 + $0x88] sm:$0xff]
    %v1087 = vld [vmem:[%s3 + $0x90] sm:$0xff]
    %v1088 = vld [vmem:[%s3 + $0x98] sm:$0xff]
    %v1089 = vld [vmem:[%s3 + $0xa0] sm:$0xff]
    %v1090 = vld [vmem:[%s3 + $0xa8] sm:$0xff]
    %v1091 = vld [vmem:[%s3 + $0xb0] sm:$0xff]
    %v1092 = vld [vmem:[%s3 + $0xb8] sm:$0xff]
    %v1093 = vld [vmem:[%s3 + $0xc0] sm:$0xff]
    %v1094 = vld [vmem:[%s3 + $0xc8] sm:$0xff]
    %v1095 = vld [vmem:[%s3 + $0xd0] sm:$0xff]
    %v1096 = vld [vmem:[%s3 + $0xd8] sm:$0xff]
    %v1097 = vld [vmem:[%s3 + $0xe0] sm:$0xff]
    %v1098 = vld [vmem:[%s3 + $0xe8] sm:$0xff]
    %v1099 = vld [vmem:[%s3 + $0xf0] sm:$0xff]
    %v1100 = vld [vmem:[%s3 + $0xf8] sm:$0xff]
    %v1101 = vpack.c.bf16 %v1067, %v1065
    %v1102 = vpack.c.bf16 %v1068, %v1066
    %s1103 = scalar_lea.vmem %s11, 1
    %v1104 = vld [vmem:[%s1103] ss:$8 sm:$0x3]
    %v1106 = vlaneseq
    %v1107 = vshrl.u32 %v1106, 7
    %v1108 = vsub.s32 0, %v1107
    %v1109 = vrot.slane %v1104, %v1108
    %v1110 = vlaneseq
    %v1111 = vshrl.u32 %v1110, 7
    %v1112 = vsub.s32 1, %v1111
    %v1113 = vrot.slane %v1104, %v1112
    %v1148 = vunpack.c.l.b16 %v1069
    %v1149 = vunpack.c.h.b16 %v1069
    %v1150 = vunpack.c.l.b16 %v1070
    %v1151 = vunpack.c.h.b16 %v1070
    %v1152 = vunpack.c.l.b16 %v1071
    %v1153 = vunpack.c.h.b16 %v1071
    %v1154 = vunpack.c.l.b16 %v1072
    %v1155 = vunpack.c.h.b16 %v1072
    %v1156 = vunpack.c.l.b16 %v1073
    %v1157 = vunpack.c.h.b16 %v1073
    %v1158 = vunpack.c.l.b16 %v1074
    %v1159 = vunpack.c.h.b16 %v1074
    %v1160 = vunpack.c.l.b16 %v1075
    %v1161 = vunpack.c.h.b16 %v1075
    %v1162 = vunpack.c.l.b16 %v1076
    %v1163 = vunpack.c.h.b16 %v1076
    %v1164 = vunpack.c.l.b16 %v1077
    %v1165 = vunpack.c.h.b16 %v1077
    %v1166 = vunpack.c.l.b16 %v1078
    %v1167 = vunpack.c.h.b16 %v1078
    %v1168 = vunpack.c.l.b16 %v1079
    %v1169 = vunpack.c.h.b16 %v1079
    %v1170 = vunpack.c.l.b16 %v1080
    %v1171 = vunpack.c.h.b16 %v1080
    %v1172 = vunpack.c.l.b16 %v1081
    %v1173 = vunpack.c.h.b16 %v1081
    %v1174 = vunpack.c.l.b16 %v1082
    %v1175 = vunpack.c.h.b16 %v1082
    %v1176 = vunpack.c.l.b16 %v1083
    %v1177 = vunpack.c.h.b16 %v1083
    %v1178 = vunpack.c.l.b16 %v1084
    %v1179 = vunpack.c.h.b16 %v1084
    %v1180 = vunpack.c.l.b16 %v1085
    %v1181 = vunpack.c.h.b16 %v1085
    %v1182 = vunpack.c.l.b16 %v1086
    %v1183 = vunpack.c.h.b16 %v1086
    %v1184 = vunpack.c.l.b16 %v1087
    %v1185 = vunpack.c.h.b16 %v1087
    %v1186 = vunpack.c.l.b16 %v1088
    %v1187 = vunpack.c.h.b16 %v1088
    %v1188 = vunpack.c.l.b16 %v1089
    %v1189 = vunpack.c.h.b16 %v1089
    %v1190 = vunpack.c.l.b16 %v1090
    %v1191 = vunpack.c.h.b16 %v1090
    %v1192 = vunpack.c.l.b16 %v1091
    %v1193 = vunpack.c.h.b16 %v1091
    %v1194 = vunpack.c.l.b16 %v1092
    %v1195 = vunpack.c.h.b16 %v1092
    %v1196 = vunpack.c.l.b16 %v1093
    %v1197 = vunpack.c.h.b16 %v1093
    %v1198 = vunpack.c.l.b16 %v1094
    %v1199 = vunpack.c.h.b16 %v1094
    %v1200 = vunpack.c.l.b16 %v1095
    %v1201 = vunpack.c.h.b16 %v1095
    %v1202 = vunpack.c.l.b16 %v1096
    %v1203 = vunpack.c.h.b16 %v1096
    %v1204 = vunpack.c.l.b16 %v1097
    %v1205 = vunpack.c.h.b16 %v1097
    %v1206 = vunpack.c.l.b16 %v1098
    %v1207 = vunpack.c.h.b16 %v1098
    %v1208 = vunpack.c.l.b16 %v1099
    %v1209 = vunpack.c.h.b16 %v1099
    %v1210 = vunpack.c.l.b16 %v1100
    %v1211 = vunpack.c.h.b16 %v1100
    %v1212 = vpack.c.b16 %v1150, %v1148
    %v1213 = vpack.c.b16 %v1151, %v1149
    %v1214 = vpack.c.b16 %v1154, %v1152
    %v1215 = vpack.c.b16 %v1155, %v1153
    %v1216 = vpack.c.b16 %v1158, %v1156
    %v1217 = vpack.c.b16 %v1159, %v1157
    %v1218 = vpack.c.b16 %v1162, %v1160
    %v1219 = vpack.c.b16 %v1163, %v1161
    %v1220 = vpack.c.b16 %v1166, %v1164
    %v1221 = vpack.c.b16 %v1167, %v1165
    %v1222 = vpack.c.b16 %v1170, %v1168
    %v1223 = vpack.c.b16 %v1171, %v1169
    %v1224 = vpack.c.b16 %v1174, %v1172
    %v1225 = vpack.c.b16 %v1175, %v1173
    %v1226 = vpack.c.b16 %v1178, %v1176
    %v1227 = vpack.c.b16 %v1179, %v1177
    %v1228 = vpack.c.b16 %v1182, %v1180
    %v1229 = vpack.c.b16 %v1183, %v1181
    %v1230 = vpack.c.b16 %v1186, %v1184
    %v1231 = vpack.c.b16 %v1187, %v1185
    %v1232 = vpack.c.b16 %v1190, %v1188
    %v1233 = vpack.c.b16 %v1191, %v1189
    %v1234 = vpack.c.b16 %v1194, %v1192
    %v1235 = vpack.c.b16 %v1195, %v1193
    %v1236 = vpack.c.b16 %v1198, %v1196
    %v1237 = vpack.c.b16 %v1199, %v1197
    %v1238 = vpack.c.b16 %v1202, %v1200
    %v1239 = vpack.c.b16 %v1203, %v1201
    %v1240 = vpack.c.b16 %v1206, %v1204
    %v1241 = vpack.c.b16 %v1207, %v1205
    %v1242 = vpack.c.b16 %v1210, %v1208
    %v1243 = vpack.c.b16 %v1211, %v1209
    %1276 = vmatprep.subr.bf16.mxu0 %v1227
    %1277 = vmatpush1.bf16.msra.mxu0 %v1226
    %1278 = vmatprep.subr.bf16.mxu0 %v1225
    %1279 = vmatpush1.bf16.msra.mxu0 %v1224
    %1280 = vmatprep.subr.bf16.mxu0 %v1223
    %1281 = vmatpush1.bf16.msra.mxu0 %v1222
    %1282 = vmatprep.subr.bf16.mxu0 %v1221
    %1283 = vmatpush1.bf16.msra.mxu0 %v1220
    %1284 = vmatprep.subr.bf16.mxu0 %v1219
    %1285 = vmatpush1.bf16.msra.mxu0 %v1218
    %1286 = vmatprep.subr.bf16.mxu0 %v1217
    %1287 = vmatpush1.bf16.msra.mxu0 %v1216
    %1288 = vmatprep.subr.bf16.mxu0 %v1215
    %1289 = vmatpush1.bf16.msra.mxu0 %v1214
    %1290 = vmatprep.subr.bf16.mxu0 %v1213
    %1291 = vmatpush1.bf16.msra.mxu0 %v1212
    %1292 = vmatprep.subr.bf16.mxu0 %v1243
    %1293 = vmatpush2.bf16.msra.mxu0 %v1242
    %1294 = vmatprep.subr.bf16.mxu0 %v1241
    %1295 = vmatpush2.bf16.msra.mxu0 %v1240
    %1296 = vmatprep.subr.bf16.mxu0 %v1239
    %1297 = vmatpush2.bf16.msra.mxu0 %v1238
    %1298 = vmatprep.subr.bf16.mxu0 %v1237
    %1299 = vmatpush2.bf16.msra.mxu0 %v1236
    %1300 = vmatprep.subr.bf16.mxu0 %v1235
    %1301 = vmatpush2.bf16.msra.mxu0 %v1234
    %1302 = vmatprep.subr.bf16.mxu0 %v1233
    %1303 = vmatpush2.bf16.msra.mxu0 %v1232
    %1304 = vmatprep.subr.bf16.mxu0 %v1231
    %1305 = vmatpush2.bf16.msra.mxu0 %v1230
    %1306 = vmatprep.subr.bf16.mxu0 %v1229
    %1307 = vmatpush2.bf16.msra.mxu0 %v1228
    %1308 = vmatprep.mubr.bf16.mxu0 %v1102
    %1309 = vmatmul.mubr.bf16.gmra.mxu0 %v1101
    %v1310 = vpop.f32.mrf.mxu0
    %v1311 = vadd.f32 %v1109, %v1310
    %v1312 = vpop.f32.mrf.mxu0
    %v1313 = vadd.f32 %v1113, %v1312
    %v1314 = vpop.f32.mrf.mxu0
    %v1315 = vadd.f32 %v1109, %v1314
    %v1316 = vpop.f32.mrf.mxu0
    %v1317 = vadd.f32 %v1113, %v1316
    %1318 = vdwg.mxu0
    %vm1319 = vcmp.gt.f32.partialorder %v1311, 0.0
    %vm1320 = vcmp.gt.f32.partialorder %v1313, 0.0
    %vm1321 = vcmp.gt.f32.partialorder %v1315, 0.0
    %vm1322 = vcmp.gt.f32.partialorder %v1317, 0.0
    %v1323 = vmul.f32 %v1311, 0.01
    %v1324 = vmul.f32 %v1313, 0.01
    %v1325 = vmul.f32 %v1315, 0.01
    %v1326 = vmul.f32 %v1317, 0.01
    %v1327 = vsel %vm1319, %v1311, %v1323
    %v1328 = vsel %vm1320, %v1313, %v1324
    %v1329 = vsel %vm1321, %v1315, %v1325
    %v1330 = vsel %vm1322, %v1317, %v1326
    %v1331 = vld [vmem:[%s4] sm:$0xf]
    %v1332 = vld [vmem:[%s4 + $0x4] sm:$0xf]
    %v1333 = vld [vmem:[%s4 + $0x8] sm:$0xf]
    %v1334 = vld [vmem:[%s4 + $0xc] sm:$0xf]
    %v1335 = vld [vmem:[%s4 + $0x10] sm:$0xf]
    %v1336 = vld [vmem:[%s4 + $0x14] sm:$0xf]
    %v1337 = vld [vmem:[%s4 + $0x18] sm:$0xf]
    %v1338 = vld [vmem:[%s4 + $0x1c] sm:$0xf]
    %v1339 = vld [vmem:[%s4 + $0x20] sm:$0xf]
    %v1340 = vld [vmem:[%s4 + $0x24] sm:$0xf]
    %v1341 = vld [vmem:[%s4 + $0x28] sm:$0xf]
    %v1342 = vld [vmem:[%s4 + $0x2c] sm:$0xf]
    %v1343 = vld [vmem:[%s4 + $0x30] sm:$0xf]
    %v1344 = vld [vmem:[%s4 + $0x34] sm:$0xf]
    %v1345 = vld [vmem:[%s4 + $0x38] sm:$0xf]
    %v1346 = vld [vmem:[%s4 + $0x3c] sm:$0xf]
    %v1347 = vld [vmem:[%s4 + $0x40] sm:$0xf]
    %v1348 = vld [vmem:[%s4 + $0x44] sm:$0xf]
    %v1349 = vld [vmem:[%s4 + $0x48] sm:$0xf]
    %v1350 = vld [vmem:[%s4 + $0x4c] sm:$0xf]
    %v1351 = vld [vmem:[%s4 + $0x50] sm:$0xf]
    %v1352 = vld [vmem:[%s4 + $0x54] sm:$0xf]
    %v1353 = vld [vmem:[%s4 + $0x58] sm:$0xf]
    %v1354 = vld [vmem:[%s4 + $0x5c] sm:$0xf]
    %v1355 = vpack.c.bf16 %v1329, %v1327
    %v1356 = vpack.c.bf16 %v1330, %v1328
    %v1357 = vld [vmem:[%s11 + $0x2] ss:$0 sm:$0xff]
    %v1382 = vunpack.c.l.b16 %v1331
    %v1383 = vunpack.c.l.b16 %v1332
    %v1384 = vunpack.c.l.b16 %v1333
    %v1385 = vunpack.c.l.b16 %v1334
    %v1386 = vunpack.c.l.b16 %v1335
    %v1387 = vunpack.c.l.b16 %v1336
    %v1388 = vunpack.c.l.b16 %v1337
    %v1389 = vunpack.c.l.b16 %v1338
    %v1390 = vunpack.c.l.b16 %v1339
    %v1391 = vunpack.c.l.b16 %v1340
    %v1392 = vunpack.c.l.b16 %v1341
    %v1393 = vunpack.c.l.b16 %v1342
    %v1394 = vunpack.c.l.b16 %v1343
    %v1395 = vunpack.c.l.b16 %v1344
    %v1396 = vunpack.c.l.b16 %v1345
    %v1397 = vunpack.c.l.b16 %v1346
    %v1398 = vunpack.c.l.b16 %v1347
    %v1399 = vunpack.c.l.b16 %v1348
    %v1400 = vunpack.c.l.b16 %v1349
    %v1401 = vunpack.c.l.b16 %v1350
    %v1402 = vunpack.c.l.b16 %v1351
    %v1403 = vunpack.c.l.b16 %v1352
    %v1404 = vunpack.c.l.b16 %v1353
    %v1405 = vunpack.c.l.b16 %v1354
    %v1406 = vpack.c.b16 %v1383, %v1382
    %v1407 = vpack.c.b16 %v1385, %v1384
    %v1408 = vpack.c.b16 %v1387, %v1386
    %v1409 = vpack.c.b16 %v1389, %v1388
    %v1410 = vpack.c.b16 %v1391, %v1390
    %v1411 = vpack.c.b16 %v1393, %v1392
    %v1412 = vpack.c.b16 %v1395, %v1394
    %v1413 = vpack.c.b16 %v1397, %v1396
    %v1414 = vpack.c.b16 %v1399, %v1398
    %v1415 = vpack.c.b16 %v1401, %v1400
    %v1416 = vpack.c.b16 %v1403, %v1402
    %v1417 = vpack.c.b16 %v1405, %v1404
    %vm1430 = vcmask 523264
    %v1432 = vsel %vm1430, %v1356, 0
    %1434 = vmatprep.subr.bf16.mxu0 0
    %1435 = vmatpush1.bf16.msra.mxu0 %v1413
    %1436 = vmatprep.subr.bf16.mxu0 0
    %1437 = vmatpush1.bf16.msra.mxu0 %v1412
    %1438 = vmatprep.subr.bf16.mxu0 0
    %1439 = vmatpush1.bf16.msra.mxu0 %v1411
    %1440 = vmatprep.subr.bf16.mxu0 0
    %1441 = vmatpush1.bf16.msra.mxu0 %v1410
    %1442 = vmatprep.subr.bf16.mxu0 0
    %1443 = vmatpush1.bf16.msra.mxu0 %v1409
    %1444 = vmatprep.subr.bf16.mxu0 0
    %1445 = vmatpush1.bf16.msra.mxu0 %v1408
    %1446 = vmatprep.subr.bf16.mxu0 0
    %1447 = vmatpush1.bf16.msra.mxu0 %v1407
    %1448 = vmatprep.subr.bf16.mxu0 0
    %1449 = vmatpush1.bf16.msra.mxu0 %v1406
    %1450 = vmatprep.subr.bf16.mxu0 0
    %1451 = vmatpush2.bf16.msra.mxu0 0
    %1452 = vmatprep.subr.bf16.mxu0 0
    %1453 = vmatpush2.bf16.msra.mxu0 0
    %1454 = vmatprep.subr.bf16.mxu0 0
    %1455 = vmatpush2.bf16.msra.mxu0 0
    %1456 = vmatprep.subr.bf16.mxu0 0
    %1457 = vmatpush2.bf16.msra.mxu0 0
    %1458 = vmatprep.subr.bf16.mxu0 0
    %1459 = vmatpush2.bf16.msra.mxu0 %v1417
    %1460 = vmatprep.subr.bf16.mxu0 0
    %1461 = vmatpush2.bf16.msra.mxu0 %v1416
    %1462 = vmatprep.subr.bf16.mxu0 0
    %1463 = vmatpush2.bf16.msra.mxu0 %v1415
    %1464 = vmatprep.subr.bf16.mxu0 0
    %1465 = vmatpush2.bf16.msra.mxu0 %v1414
    %1466 = vmatprep.mubr.bf16.mxu0 %v1432
    %1467 = vmatmul.mubr.bf16.gmra.mxu0 %v1355
    %v1468 = vpop.f32.mrf.mxu0
    %v1469 = vadd.f32 %v1357, %v1468
    %v1470 = vpop.f32.mrf.mxu0
    %v1471 = vpop.f32.mrf.mxu0
    %v1472 = vadd.f32 %v1357, %v1471
    %v1473 = vpop.f32.mrf.mxu0
    %1474 = vdwg.mxu0
    %vm1475 = vcmp.gt.f32.partialorder %v1469, 0.0
    %vm1476 = vcmp.gt.f32.partialorder %v1472, 0.0
    %v1477 = vmul.f32 %v1469, 0.01
    %v1478 = vmul.f32 %v1472, 0.01
    %v1479 = vsel %vm1475, %v1469, %v1477
    %v1480 = vsel %vm1476, %v1472, %v1478
    %v1481 = vld [vmem:[%s5] sm:$0xf]
    %v1482 = vld [vmem:[%s5 + $0x4] sm:$0xf]
    %v1483 = vld [vmem:[%s5 + $0x8] sm:$0xf]
    %v1484 = vld [vmem:[%s5 + $0xc] sm:$0xf]
    %v1485 = vld [vmem:[%s5 + $0x10] sm:$0xf]
    %v1486 = vld [vmem:[%s5 + $0x14] sm:$0xf]
    %v1487 = vld [vmem:[%s5 + $0x18] sm:$0xf]
    %v1488 = vld [vmem:[%s5 + $0x1c] sm:$0xf]
    %v1489 = vld [vmem:[%s5 + $0x20] sm:$0xf]
    %v1490 = vld [vmem:[%s5 + $0x24] sm:$0xf]
    %v1491 = vld [vmem:[%s5 + $0x28] sm:$0xf]
    %v1492 = vld [vmem:[%s5 + $0x2c] sm:$0xf]
    %v1493 = vld [vmem:[%s5 + $0x30] sm:$0xf]
    %v1494 = vld [vmem:[%s5 + $0x34] sm:$0xf]
    %v1495 = vld [vmem:[%s5 + $0x38] sm:$0xf]
    %v1496 = vld [vmem:[%s5 + $0x3c] sm:$0xf]
    %v1497 = vpack.c.bf16 %v1480, %v1479
    %v1498 = vld [vmem:[%s11 + $0x3] ss:$0 sm:$0xff]
    %v1515 = vunpack.c.l.b16 %v1481
    %v1516 = vunpack.c.l.b16 %v1482
    %v1517 = vunpack.c.l.b16 %v1483
    %v1518 = vunpack.c.l.b16 %v1484
    %v1519 = vunpack.c.l.b16 %v1485
    %v1520 = vunpack.c.l.b16 %v1486
    %v1521 = vunpack.c.l.b16 %v1487
    %v1522 = vunpack.c.l.b16 %v1488
    %v1523 = vunpack.c.l.b16 %v1489
    %v1524 = vunpack.c.l.b16 %v1490
    %v1525 = vunpack.c.l.b16 %v1491
    %v1526 = vunpack.c.l.b16 %v1492
    %v1527 = vunpack.c.l.b16 %v1493
    %v1528 = vunpack.c.l.b16 %v1494
    %v1529 = vunpack.c.l.b16 %v1495
    %v1530 = vunpack.c.l.b16 %v1496
    %v1531 = vpack.c.b16 %v1516, %v1515
    %v1532 = vpack.c.b16 %v1518, %v1517
    %v1533 = vpack.c.b16 %v1520, %v1519
    %v1534 = vpack.c.b16 %v1522, %v1521
    %v1535 = vpack.c.b16 %v1524, %v1523
    %v1536 = vpack.c.b16 %v1526, %v1525
    %v1537 = vpack.c.b16 %v1528, %v1527
    %v1538 = vpack.c.b16 %v1530, %v1529
    %1547 = vmatprep.subr.bf16.mxu0 0
    %1548 = vmatpush1.bf16.msra.mxu0 %v1538
    %1549 = vmatprep.subr.bf16.mxu0 0
    %1550 = vmatpush1.bf16.msra.mxu0 %v1537
    %1551 = vmatprep.subr.bf16.mxu0 0
    %1552 = vmatpush1.bf16.msra.mxu0 %v1536
    %1553 = vmatprep.subr.bf16.mxu0 0
    %1554 = vmatpush1.bf16.msra.mxu0 %v1535
    %1555 = vmatprep.subr.bf16.mxu0 0
    %1556 = vmatpush1.bf16.msra.mxu0 %v1534
    %1557 = vmatprep.subr.bf16.mxu0 0
    %1558 = vmatpush1.bf16.msra.mxu0 %v1533
    %1559 = vmatprep.subr.bf16.mxu0 0
    %1560 = vmatpush1.bf16.msra.mxu0 %v1532
    %1561 = vmatprep.subr.bf16.mxu0 0
    %1562 = vmatpush1.bf16.msra.mxu0 %v1531
    %1563 = vmatprep.subr.bf16.mxu0 0
    %1564 = vmatpush2.bf16.msra.mxu0 0
    %1565 = vmatprep.subr.bf16.mxu0 0
    %1566 = vmatpush2.bf16.msra.mxu0 0
    %1567 = vmatprep.subr.bf16.mxu0 0
    %1568 = vmatpush2.bf16.msra.mxu0 0
    %1569 = vmatprep.subr.bf16.mxu0 0
    %1570 = vmatpush2.bf16.msra.mxu0 0
    %1571 = vmatprep.subr.bf16.mxu0 0
    %1572 = vmatpush2.bf16.msra.mxu0 0
    %1573 = vmatprep.subr.bf16.mxu0 0
    %1574 = vmatpush2.bf16.msra.mxu0 0
    %1575 = vmatprep.subr.bf16.mxu0 0
    %1576 = vmatpush2.bf16.msra.mxu0 0
    %1577 = vmatprep.subr.bf16.mxu0 0
    %1578 = vmatpush2.bf16.msra.mxu0 0
    %1579 = vmatprep.mubr.bf16.mxu0 0
    %1580 = vmatmul.mubr.bf16.gmra.mxu0 %v1497
    %v1581 = vpop.f32.mrf.mxu0
    %v1582 = vadd.f32 %v1498, %v1581
    %v1583 = vpop.f32.mrf.mxu0
    %v1584 = vpop.f32.mrf.mxu0
    %v1585 = vadd.f32 %v1498, %v1584
    %v1586 = vpop.f32.mrf.mxu0
    %1587 = vdwg.mxu0
    %vm1588 = vcmp.gt.f32.partialorder %v1582, 0.0
    %vm1589 = vcmp.gt.f32.partialorder %v1585, 0.0
    %v1590 = vmul.f32 %v1582, 0.01
    %v1591 = vmul.f32 %v1585, 0.01
    %v1592 = vsel %vm1588, %v1582, %v1590
    %v1593 = vsel %vm1589, %v1585, %v1591
    %v1594 = vld [vmem:[%s6] sm:$0xf]
    %v1595 = vld [vmem:[%s6 + $0x4] sm:$0xf]
    %v1596 = vld [vmem:[%s6 + $0x8] sm:$0xf]
    %v1597 = vld [vmem:[%s6 + $0xc] sm:$0xf]
    %v1598 = vld [vmem:[%s6 + $0x10] sm:$0xf]
    %v1599 = vld [vmem:[%s6 + $0x14] sm:$0xf]
    %v1600 = vld [vmem:[%s6 + $0x18] sm:$0xf]
    %v1601 = vld [vmem:[%s6 + $0x1c] sm:$0xf]
    %v1602 = vpack.c.bf16 %v1593, %v1592
    %v1603 = vld [vmem:[%s11 + $0x4] ss:$0 sm:$0xff]
    %v1612 = vunpack.c.l.b16 %v1594
    %v1613 = vunpack.c.l.b16 %v1595
    %v1614 = vunpack.c.l.b16 %v1596
    %v1615 = vunpack.c.l.b16 %v1597
    %v1616 = vunpack.c.l.b16 %v1598
    %v1617 = vunpack.c.l.b16 %v1599
    %v1618 = vunpack.c.l.b16 %v1600
    %v1619 = vunpack.c.l.b16 %v1601
    %v1620 = vpack.c.b16 %v1613, %v1612
    %v1621 = vpack.c.b16 %v1615, %v1614
    %v1622 = vpack.c.b16 %v1617, %v1616
    %v1623 = vpack.c.b16 %v1619, %v1618
    %v1629 = vsel %vm1430, %v1602, 0
    %1631 = vmatprep.subr.bf16.mxu0 0
    %1632 = vmatpush1.bf16.msra.mxu0 0
    %1633 = vmatprep.subr.bf16.mxu0 0
    %1634 = vmatpush1.bf16.msra.mxu0 0
    %1635 = vmatprep.subr.bf16.mxu0 0
    %1636 = vmatpush1.bf16.msra.mxu0 0
    %1637 = vmatprep.subr.bf16.mxu0 0
    %1638 = vmatpush1.bf16.msra.mxu0 0
    %1639 = vmatprep.subr.bf16.mxu0 0
    %1640 = vmatpush1.bf16.msra.mxu0 %v1623
    %1641 = vmatprep.subr.bf16.mxu0 0
    %1642 = vmatpush1.bf16.msra.mxu0 %v1622
    %1643 = vmatprep.subr.bf16.mxu0 0
    %1644 = vmatpush1.bf16.msra.mxu0 %v1621
    %1645 = vmatprep.subr.bf16.mxu0 0
    %1646 = vmatpush1.bf16.msra.mxu0 %v1620
    %1647 = vmatprep.subr.bf16.mxu0 0
    %1648 = vmatpush2.bf16.msra.mxu0 0
    %1649 = vmatprep.subr.bf16.mxu0 0
    %1650 = vmatpush2.bf16.msra.mxu0 0
    %1651 = vmatprep.subr.bf16.mxu0 0
    %1652 = vmatpush2.bf16.msra.mxu0 0
    %1653 = vmatprep.subr.bf16.mxu0 0
    %1654 = vmatpush2.bf16.msra.mxu0 0
    %1655 = vmatprep.subr.bf16.mxu0 0
    %1656 = vmatpush2.bf16.msra.mxu0 0
    %1657 = vmatprep.subr.bf16.mxu0 0
    %1658 = vmatpush2.bf16.msra.mxu0 0
    %1659 = vmatprep.subr.bf16.mxu0 0
    %1660 = vmatpush2.bf16.msra.mxu0 0
    %1661 = vmatprep.subr.bf16.mxu0 0
    %1662 = vmatpush2.bf16.msra.mxu0 0
    %1663 = vmatprep.mubr.bf16.mxu0 0
    %1664 = vmatmul.mubr.bf16.gmra.mxu0 %v1629
    %v1665 = vpop.f32.mrf.mxu0
    %v1666 = vadd.f32 %v1603, %v1665
    %v1667 = vpop.f32.mrf.mxu0
    %v1668 = vpop.f32.mrf.mxu0
    %v1669 = vadd.f32 %v1603, %v1668
    %v1670 = vpop.f32.mrf.mxu0
    %1671 = vdwg.mxu0
    %vm1672 = vcmp.gt.f32.partialorder %v1666, 0.0
    %vm1673 = vcmp.gt.f32.partialorder %v1669, 0.0
    %v1674 = vmul.f32 %v1666, 0.01
    %v1675 = vmul.f32 %v1669, 0.01
    %v1676 = vsel %vm1672, %v1666, %v1674
    %v1677 = vsel %vm1673, %v1669, %v1675
    %v1678 = vld [vmem:[%s7] sm:$0xf]
    %v1679 = vld [vmem:[%s7 + $0x4] sm:$0xf]
    %v1680 = vld [vmem:[%s7 + $0x8] sm:$0xf]
    %v1681 = vld [vmem:[%s7 + $0xc] sm:$0xf]
    %v1682 = vpack.c.bf16 %v1677, %v1676
    %v1683 = vld [vmem:[%s1] sm:$0xf]
    %v1684 = vld [vmem:[%s1 + $0x4] sm:$0xf]
    %v1685 = vld [vmem:[%s8] sm:$0xf]
    %v1686 = vld [vmem:[%s8 + $0x4] sm:$0xf]
    %v1687 = vld [vmem:[%s8 + $0x8] sm:$0xf]
    %v1688 = vld [vmem:[%s8 + $0xc] sm:$0xf]
    %v1691 = vunpack.c.l.b16 %v1683
    %v1692 = vunpack.c.l.b16 %v1684
    %v1693 = vpack.c.b16 %v1692, %v1691
    %v1698 = vunpack.c.l.b16 %v1685
    %v1699 = vunpack.c.l.b16 %v1686
    %v1700 = vunpack.c.l.b16 %v1687
    %v1701 = vunpack.c.l.b16 %v1688
    %v1702 = vpack.c.b16 %v1699, %v1698
    %v1703 = vpack.c.b16 %v1701, %v1700
    %vm1706 = vcmask 261120
    %v1708 = vsel %vm1706, %v1693, 0
    %1710 = vmatprep.subr.bf16.mxu0 0
    %1711 = vmatpush1.bf16.msra.mxu0 0
    %1712 = vmatprep.subr.bf16.mxu0 0
    %1713 = vmatpush1.bf16.msra.mxu0 0
    %1714 = vmatprep.subr.bf16.mxu0 0
    %1715 = vmatpush1.bf16.msra.mxu0 0
    %1716 = vmatprep.subr.bf16.mxu0 0
    %1717 = vmatpush1.bf16.msra.mxu0 0
    %1718 = vmatprep.subr.bf16.mxu0 0
    %1719 = vmatpush1.bf16.msra.mxu0 0
    %1720 = vmatprep.subr.bf16.mxu0 0
    %1721 = vmatpush1.bf16.msra.mxu0 0
    %1722 = vmatprep.subr.bf16.mxu0 0
    %1723 = vmatpush1.bf16.msra.mxu0 %v1703
    %1724 = vmatprep.subr.bf16.mxu0 0
    %1725 = vmatpush1.bf16.msra.mxu0 %v1702
    %1726 = vmatprep.subr.bf16.mxu0 0
    %1727 = vmatpush2.bf16.msra.mxu0 0
    %1728 = vmatprep.subr.bf16.mxu0 0
    %1729 = vmatpush2.bf16.msra.mxu0 0
    %1730 = vmatprep.subr.bf16.mxu0 0
    %1731 = vmatpush2.bf16.msra.mxu0 0
    %1732 = vmatprep.subr.bf16.mxu0 0
    %1733 = vmatpush2.bf16.msra.mxu0 0
    %1734 = vmatprep.subr.bf16.mxu0 0
    %1735 = vmatpush2.bf16.msra.mxu0 0
    %1736 = vmatprep.subr.bf16.mxu0 0
    %1737 = vmatpush2.bf16.msra.mxu0 0
    %1738 = vmatprep.subr.bf16.mxu0 0
    %1739 = vmatpush2.bf16.msra.mxu0 0
    %1740 = vmatprep.subr.bf16.mxu0 0
    %1741 = vmatpush2.bf16.msra.mxu0 0
    %1742 = vmatprep.mubr.bf16.mxu0 0
    %1743 = vmatmul.mubr.bf16.gmra.mxu0 %v1708
    %v1744 = vpop.f32.mrf.mxu0
    %v1745 = vadd.f32 0.0, %v1744
    %v1746 = vpop.f32.mrf.mxu0
    %v1747 = vpop.f32.mrf.mxu0
    %v1748 = vadd.f32 0.0, %v1747
    %v1749 = vpop.f32.mrf.mxu0
    %1750 = vdwg.mxu0
    %v1755 = vunpack.c.l.b16 %v1678
    %v1756 = vunpack.c.l.b16 %v1679
    %v1757 = vunpack.c.l.b16 %v1680
    %v1758 = vunpack.c.l.b16 %v1681
    %v1759 = vpack.c.b16 %v1756, %v1755
    %v1760 = vpack.c.b16 %v1758, %v1757
    %v1764 = vsel %vm1706, %v1682, 0
    %1766 = vmatprep.subr.bf16.mxu0 0
    %1767 = vmatpush1.bf16.msra.mxu0 0
    %1768 = vmatprep.subr.bf16.mxu0 0
    %1769 = vmatpush1.bf16.msra.mxu0 0
    %1770 = vmatprep.subr.bf16.mxu0 0
    %1771 = vmatpush1.bf16.msra.mxu0 0
    %1772 = vmatprep.subr.bf16.mxu0 0
    %1773 = vmatpush1.bf16.msra.mxu0 0
    %1774 = vmatprep.subr.bf16.mxu0 0
    %1775 = vmatpush1.bf16.msra.mxu0 0
    %1776 = vmatprep.subr.bf16.mxu0 0
    %1777 = vmatpush1.bf16.msra.mxu0 0
    %1778 = vmatprep.subr.bf16.mxu0 0
    %1779 = vmatpush1.bf16.msra.mxu0 %v1760
    %1780 = vmatprep.subr.bf16.mxu0 0
    %1781 = vmatpush1.bf16.msra.mxu0 %v1759
    %1782 = vmatprep.subr.bf16.mxu0 0
    %1783 = vmatpush2.bf16.msra.mxu0 0
    %1784 = vmatprep.subr.bf16.mxu0 0
    %1785 = vmatpush2.bf16.msra.mxu0 0
    %1786 = vmatprep.subr.bf16.mxu0 0
    %1787 = vmatpush2.bf16.msra.mxu0 0
    %1788 = vmatprep.subr.bf16.mxu0 0
    %1789 = vmatpush2.bf16.msra.mxu0 0
    %1790 = vmatprep.subr.bf16.mxu0 0
    %1791 = vmatpush2.bf16.msra.mxu0 0
    %1792 = vmatprep.subr.bf16.mxu0 0
    %1793 = vmatpush2.bf16.msra.mxu0 0
    %1794 = vmatprep.subr.bf16.mxu0 0
    %1795 = vmatpush2.bf16.msra.mxu0 0
    %1796 = vmatprep.subr.bf16.mxu0 0
    %1797 = vmatpush2.bf16.msra.mxu0 0
    %1798 = vmatprep.mubr.bf16.mxu0 0
    %1799 = vmatmul.mubr.bf16.gmra.mxu0 %v1764
    %v1800 = vpop.f32.mrf.mxu0
    %v1801 = vadd.f32 %v1745, %v1800
    %v1802 = vpop.f32.mrf.mxu0
    %v1803 = vpop.f32.mrf.mxu0
    %v1804 = vadd.f32 %v1748, %v1803
    %v1805 = vpop.f32.mrf.mxu0
    %1806 = vdwg.mxu0
    %v1807 = vld [vmem:[%s11 + $0x5] ss:$0 sm:$0xff]
    %v1808 = vadd.f32 %v1801, %v1807
    %v1809 = vadd.f32 %v1804, %v1807
    %vm1810 = vcmp.gt.f32.partialorder %v1808, 0.0
    %vm1811 = vcmp.gt.f32.partialorder %v1809, 0.0
    %v1812 = vmul.f32 %v1808, 0.01
    %v1813 = vmul.f32 %v1809, 0.01
    %v1814 = vsel %vm1810, %v1808, %v1812
    %v1815 = vsel %vm1811, %v1809, %v1813
    %v1816 = vld [vmem:[%s9] sm:$0xf]
    %v1817 = vld [vmem:[%s9 + $0x4] sm:$0xf]
    %v1818 = vld [vmem:[%s9 + $0x8] sm:$0xf]
    %v1819 = vld [vmem:[%s9 + $0xc] sm:$0xf]
    %v1820 = vpack.c.bf16 %v1815, %v1814
    %v1821 = vld [vmem:[%s11 + $0x6] ss:$0 sm:$0xff]
    %v1826 = vunpack.c.l.b16 %v1816
    %v1827 = vunpack.c.l.b16 %v1817
    %v1828 = vunpack.c.l.b16 %v1818
    %v1829 = vunpack.c.l.b16 %v1819
    %v1830 = vpack.c.b16 %v1827, %v1826
    %v1831 = vpack.c.b16 %v1829, %v1828
    %v1835 = vsel %vm1706, %v1820, 0
    %1837 = vmatprep.subr.bf16.mxu0 0
    %1838 = vmatpush1.bf16.msra.mxu0 0
    %1839 = vmatprep.subr.bf16.mxu0 0
    %1840 = vmatpush1.bf16.msra.mxu0 0
    %1841 = vmatprep.subr.bf16.mxu0 0
    %1842 = vmatpush1.bf16.msra.mxu0 0
    %1843 = vmatprep.subr.bf16.mxu0 0
    %1844 = vmatpush1.bf16.msra.mxu0 0
    %1845 = vmatprep.subr.bf16.mxu0 0
    %1846 = vmatpush1.bf16.msra.mxu0 0
    %1847 = vmatprep.subr.bf16.mxu0 0
    %1848 = vmatpush1.bf16.msra.mxu0 0
    %1849 = vmatprep.subr.bf16.mxu0 0
    %1850 = vmatpush1.bf16.msra.mxu0 %v1831
    %1851 = vmatprep.subr.bf16.mxu0 0
    %1852 = vmatpush1.bf16.msra.mxu0 %v1830
    %1853 = vmatprep.subr.bf16.mxu0 0
    %1854 = vmatpush2.bf16.msra.mxu0 0
    %1855 = vmatprep.subr.bf16.mxu0 0
    %1856 = vmatpush2.bf16.msra.mxu0 0
    %1857 = vmatprep.subr.bf16.mxu0 0
    %1858 = vmatpush2.bf16.msra.mxu0 0
    %1859 = vmatprep.subr.bf16.mxu0 0
    %1860 = vmatpush2.bf16.msra.mxu0 0
    %1861 = vmatprep.subr.bf16.mxu0 0
    %1862 = vmatpush2.bf16.msra.mxu0 0
    %1863 = vmatprep.subr.bf16.mxu0 0
    %1864 = vmatpush2.bf16.msra.mxu0 0
    %1865 = vmatprep.subr.bf16.mxu0 0
    %1866 = vmatpush2.bf16.msra.mxu0 0
    %1867 = vmatprep.subr.bf16.mxu0 0
    %1868 = vmatpush2.bf16.msra.mxu0 0
    %1869 = vmatprep.mubr.bf16.mxu0 0
    %1870 = vmatmul.mubr.bf16.gmra.mxu0 %v1835
    %v1871 = vpop.f32.mrf.mxu0
    %v1872 = vadd.f32 %v1821, %v1871
    %v1873 = vpop.f32.mrf.mxu0
    %v1874 = vpop.f32.mrf.mxu0
    %v1875 = vadd.f32 %v1821, %v1874
    %v1876 = vpop.f32.mrf.mxu0
    %1877 = vdwg.mxu0
    %vm1878 = vcmp.gt.f32.partialorder %v1872, 0.0
    %vm1879 = vcmp.gt.f32.partialorder %v1875, 0.0
    %v1880 = vmul.f32 %v1872, 0.01
    %v1881 = vmul.f32 %v1875, 0.01
    %v1882 = vsel %vm1878, %v1872, %v1880
    %v1883 = vsel %vm1879, %v1875, %v1881
    %v1884 = vld [vmem:[%s10] sm:$0xf]
    %v1885 = vld [vmem:[%s10 + $0x4] sm:$0xf]
    %v1886 = vld [vmem:[%s10 + $0x8] sm:$0xf]
    %v1887 = vld [vmem:[%s10 + $0xc] sm:$0xf]
    %v1888 = vld [vmem:[%s10 + $0x10] sm:$0xf]
    %v1889 = vld [vmem:[%s10 + $0x14] sm:$0xf]
    %v1890 = vld [vmem:[%s10 + $0x18] sm:$0xf]
    %v1891 = vld [vmem:[%s10 + $0x1c] sm:$0xf]
    %v1892 = vpack.c.bf16 %v1883, %v1882
    %v1893 = vld [vmem:[%s11 + $0x7] ss:$0 sm:$0xff]
    %v1902 = vunpack.c.l.b16 %v1884
    %v1903 = vunpack.c.l.b16 %v1885
    %v1904 = vunpack.c.l.b16 %v1886
    %v1905 = vunpack.c.l.b16 %v1887
    %v1906 = vunpack.c.l.b16 %v1888
    %v1907 = vunpack.c.l.b16 %v1889
    %v1908 = vunpack.c.l.b16 %v1890
    %v1909 = vunpack.c.l.b16 %v1891
    %v1910 = vpack.c.b16 %v1903, %v1902
    %v1911 = vpack.c.b16 %v1905, %v1904
    %v1912 = vpack.c.b16 %v1907, %v1906
    %v1913 = vpack.c.b16 %v1909, %v1908
    %v1919 = vsel %vm1430, %v1892, 0
    %1921 = vmatprep.subr.bf16.mxu0 0
    %1922 = vmatpush1.bf16.msra.mxu0 0
    %1923 = vmatprep.subr.bf16.mxu0 0
    %1924 = vmatpush1.bf16.msra.mxu0 0
    %1925 = vmatprep.subr.bf16.mxu0 0
    %1926 = vmatpush1.bf16.msra.mxu0 0
    %1927 = vmatprep.subr.bf16.mxu0 0
    %1928 = vmatpush1.bf16.msra.mxu0 0
    %1929 = vmatprep.subr.bf16.mxu0 0
    %1930 = vmatpush1.bf16.msra.mxu0 %v1913
    %1931 = vmatprep.subr.bf16.mxu0 0
    %1932 = vmatpush1.bf16.msra.mxu0 %v1912
    %1933 = vmatprep.subr.bf16.mxu0 0
    %1934 = vmatpush1.bf16.msra.mxu0 %v1911
    %1935 = vmatprep.subr.bf16.mxu0 0
    %1936 = vmatpush1.bf16.msra.mxu0 %v1910
    %1937 = vmatprep.subr.bf16.mxu0 0
    %1938 = vmatpush2.bf16.msra.mxu0 0
    %1939 = vmatprep.subr.bf16.mxu0 0
    %1940 = vmatpush2.bf16.msra.mxu0 0
    %1941 = vmatprep.subr.bf16.mxu0 0
    %1942 = vmatpush2.bf16.msra.mxu0 0
    %1943 = vmatprep.subr.bf16.mxu0 0
    %1944 = vmatpush2.bf16.msra.mxu0 0
    %1945 = vmatprep.subr.bf16.mxu0 0
    %1946 = vmatpush2.bf16.msra.mxu0 0
    %1947 = vmatprep.subr.bf16.mxu0 0
    %1948 = vmatpush2.bf16.msra.mxu0 0
    %1949 = vmatprep.subr.bf16.mxu0 0
    %1950 = vmatpush2.bf16.msra.mxu0 0
    %1951 = vmatprep.subr.bf16.mxu0 0
    %1952 = vmatpush2.bf16.msra.mxu0 0
    %1953 = vmatprep.mubr.bf16.mxu0 0
    %1954 = vmatmul.mubr.bf16.gmra.mxu0 %v1919
    %v1955 = vpop.f32.mrf.mxu0
    %v1956 = vadd.f32 %v1893, %v1955
    %v1957 = vpop.f32.mrf.mxu0
    %v1958 = vpop.f32.mrf.mxu0
    %v1959 = vadd.f32 %v1893, %v1958
    %v1960 = vpop.f32.mrf.mxu0
    %1961 = vdwg.mxu0
    %vm1962 = vcmp.gt.f32.partialorder %v1956, 0.0
    %vm1963 = vcmp.gt.f32.partialorder %v1959, 0.0
    %v1964 = vmul.f32 %v1956, 0.01
    %v1965 = vmul.f32 %v1959, 0.01
    %v1966 = vsel %vm1962, %v1956, %v1964
    %v1967 = vsel %vm1963, %v1959, %v1965
    %v1968 = vld [vmem:[%s10 + $0x20] sm:$0xf]
    %v1969 = vld [vmem:[%s10 + $0x24] sm:$0xf]
    %v1970 = vpack.c.bf16 %v1967, %v1966
    %v1971 = vld [vmem:[%s11 + $0x10] ss:$0 sm:$0xff]
    %v1974 = vunpack.c.l.b16 %v1968
    %v1975 = vunpack.c.l.b16 %v1969
    %v1976 = vpack.c.b16 %v1975, %v1974
    %vm1978 = vcmask 130048
    %v1980 = vsel %vm1978, %v1970, 0
    %1982 = vmatprep.subr.bf16.mxu0 0
    %1983 = vmatpush1.bf16.msra.mxu0 0
    %1984 = vmatprep.subr.bf16.mxu0 0
    %1985 = vmatpush1.bf16.msra.mxu0 0
    %1986 = vmatprep.subr.bf16.mxu0 0
    %1987 = vmatpush1.bf16.msra.mxu0 0
    %1988 = vmatprep.subr.bf16.mxu0 0
    %1989 = vmatpush1.bf16.msra.mxu0 0
    %1990 = vmatprep.subr.bf16.mxu0 0
    %1991 = vmatpush1.bf16.msra.mxu0 0
    %1992 = vmatprep.subr.bf16.mxu0 0
    %1993 = vmatpush1.bf16.msra.mxu0 0
    %1994 = vmatprep.subr.bf16.mxu0 0
    %1995 = vmatpush1.bf16.msra.mxu0 0
    %1996 = vmatprep.subr.bf16.mxu0 0
    %1997 = vmatpush1.bf16.msra.mxu0 %v1976
    %1998 = vmatprep.subr.bf16.mxu0 0
    %1999 = vmatpush2.bf16.msra.mxu0 0
    %2000 = vmatprep.subr.bf16.mxu0 0
    %2001 = vmatpush2.bf16.msra.mxu0 0
    %2002 = vmatprep.subr.bf16.mxu0 0
    %2003 = vmatpush2.bf16.msra.mxu0 0
    %2004 = vmatprep.subr.bf16.mxu0 0
    %2005 = vmatpush2.bf16.msra.mxu0 0
    %2006 = vmatprep.subr.bf16.mxu0 0
    %2007 = vmatpush2.bf16.msra.mxu0 0
    %2008 = vmatprep.subr.bf16.mxu0 0
    %2009 = vmatpush2.bf16.msra.mxu0 0
    %2010 = vmatprep.subr.bf16.mxu0 0
    %2011 = vmatpush2.bf16.msra.mxu0 0
    %2012 = vmatprep.subr.bf16.mxu0 0
    %2013 = vmatpush2.bf16.msra.mxu0 0
    %2014 = vmatprep.mubr.bf16.mxu0 0
    %2015 = vmatmul.mubr.bf16.gmra.mxu0 %v1980
    %v2016 = vpop.f32.mrf.mxu0
    %v2017 = vadd.f32 %v1971, %v2016
    %v2018 = vpop.f32.mrf.mxu0
    %v2019 = vpop.f32.mrf.mxu0
    %v2020 = vadd.f32 %v1971, %v2019
    %v2021 = vpop.f32.mrf.mxu0
    %2022 = vdwg.mxu0
    %vm2023 = vcmp.gt.f32.partialorder %v2017, 0.0
    %vm2024 = vcmp.gt.f32.partialorder %v2020, 0.0
    %v2025 = vmul.f32 %v2017, 0.01
    %v2026 = vmul.f32 %v2020, 0.01
    %v2027 = vsel %vm2023, %v2017, %v2025
    %v2028 = vsel %vm2024, %v2020, %v2026
    %v2029 = vld [vmem:[%s10 + $0x28] sm:$0xf]
    %v2030 = vld [vmem:[%s10 + $0x2c] sm:$0xf]
    %v2031 = vpack.c.bf16 %v2028, %v2027
    %v2032 = vld [vmem:[%s10 + $0x30] sm:$0xf]
    %v2033 = vld [vmem:[%s10 + $0x34] sm:$0xf]
    %v2034 = vld [vmem:[%s10 + $0x38] sm:$0xf]
    %v2035 = vld [vmem:[%s10 + $0x3c] sm:$0xf]
    %v2036 = vld [vmem:[%s10 + $0x40] sm:$0xf]
    %v2037 = vld [vmem:[%s10 + $0x44] sm:$0xf]
    %v2038 = vld [vmem:[%s10 + $0x48] sm:$0xf]
    %v2039 = vld [vmem:[%s10 + $0x4c] sm:$0xf]
    %v2048 = vunpack.c.l.b16 %v2032
    %v2049 = vunpack.c.l.b16 %v2033
    %v2050 = vunpack.c.l.b16 %v2034
    %v2051 = vunpack.c.l.b16 %v2035
    %v2052 = vunpack.c.l.b16 %v2036
    %v2053 = vunpack.c.l.b16 %v2037
    %v2054 = vunpack.c.l.b16 %v2038
    %v2055 = vunpack.c.l.b16 %v2039
    %v2056 = vpack.c.b16 %v2049, %v2048
    %v2057 = vpack.c.b16 %v2051, %v2050
    %v2058 = vpack.c.b16 %v2053, %v2052
    %v2059 = vpack.c.b16 %v2055, %v2054
    %2064 = vmatprep.subr.bf16.mxu0 0
    %2065 = vmatpush1.bf16.msra.mxu0 0
    %2066 = vmatprep.subr.bf16.mxu0 0
    %2067 = vmatpush1.bf16.msra.mxu0 0
    %2068 = vmatprep.subr.bf16.mxu0 0
    %2069 = vmatpush1.bf16.msra.mxu0 0
    %2070 = vmatprep.subr.bf16.mxu0 0
    %2071 = vmatpush1.bf16.msra.mxu0 0
    %2072 = vmatprep.subr.bf16.mxu0 0
    %2073 = vmatpush1.bf16.msra.mxu0 %v2059
    %2074 = vmatprep.subr.bf16.mxu0 0
    %2075 = vmatpush1.bf16.msra.mxu0 %v2058
    %2076 = vmatprep.subr.bf16.mxu0 0
    %2077 = vmatpush1.bf16.msra.mxu0 %v2057
    %2078 = vmatprep.subr.bf16.mxu0 0
    %2079 = vmatpush1.bf16.msra.mxu0 %v2056
    %2080 = vmatprep.subr.bf16.mxu0 0
    %2081 = vmatpush2.bf16.msra.mxu0 0
    %2082 = vmatprep.subr.bf16.mxu0 0
    %2083 = vmatpush2.bf16.msra.mxu0 0
    %2084 = vmatprep.subr.bf16.mxu0 0
    %2085 = vmatpush2.bf16.msra.mxu0 0
    %2086 = vmatprep.subr.bf16.mxu0 0
    %2087 = vmatpush2.bf16.msra.mxu0 0
    %2088 = vmatprep.subr.bf16.mxu0 0
    %2089 = vmatpush2.bf16.msra.mxu0 0
    %2090 = vmatprep.subr.bf16.mxu0 0
    %2091 = vmatpush2.bf16.msra.mxu0 0
    %2092 = vmatprep.subr.bf16.mxu0 0
    %2093 = vmatpush2.bf16.msra.mxu0 0
    %2094 = vmatprep.subr.bf16.mxu0 0
    %2095 = vmatpush2.bf16.msra.mxu0 0
    %2096 = vmatprep.mubr.bf16.mxu0 0
    %2097 = vmatmul.mubr.bf16.gmra.mxu0 %v1919
    %v2098 = vpop.f32.mrf.mxu0
    %v2099 = vadd.f32 0.0, %v2098
    %v2100 = vpop.f32.mrf.mxu0
    %v2101 = vpop.f32.mrf.mxu0
    %v2102 = vadd.f32 0.0, %v2101
    %v2103 = vpop.f32.mrf.mxu0
    %2104 = vdwg.mxu0
    %v2107 = vunpack.c.l.b16 %v2029
    %v2108 = vunpack.c.l.b16 %v2030
    %v2109 = vpack.c.b16 %v2108, %v2107
    %v2112 = vsel %vm1978, %v2031, 0
    %2114 = vmatprep.subr.bf16.mxu0 0
    %2115 = vmatpush1.bf16.msra.mxu0 0
    %2116 = vmatprep.subr.bf16.mxu0 0
    %2117 = vmatpush1.bf16.msra.mxu0 0
    %2118 = vmatprep.subr.bf16.mxu0 0
    %2119 = vmatpush1.bf16.msra.mxu0 0
    %2120 = vmatprep.subr.bf16.mxu0 0
    %2121 = vmatpush1.bf16.msra.mxu0 0
    %2122 = vmatprep.subr.bf16.mxu0 0
    %2123 = vmatpush1.bf16.msra.mxu0 0
    %2124 = vmatprep.subr.bf16.mxu0 0
    %2125 = vmatpush1.bf16.msra.mxu0 0
    %2126 = vmatprep.subr.bf16.mxu0 0
    %2127 = vmatpush1.bf16.msra.mxu0 0
    %2128 = vmatprep.subr.bf16.mxu0 0
    %2129 = vmatpush1.bf16.msra.mxu0 %v2109
    %2130 = vmatprep.subr.bf16.mxu0 0
    %2131 = vmatpush2.bf16.msra.mxu0 0
    %2132 = vmatprep.subr.bf16.mxu0 0
    %2133 = vmatpush2.bf16.msra.mxu0 0
    %2134 = vmatprep.subr.bf16.mxu0 0
    %2135 = vmatpush2.bf16.msra.mxu0 0
    %2136 = vmatprep.subr.bf16.mxu0 0
    %2137 = vmatpush2.bf16.msra.mxu0 0
    %2138 = vmatprep.subr.bf16.mxu0 0
    %2139 = vmatpush2.bf16.msra.mxu0 0
    %2140 = vmatprep.subr.bf16.mxu0 0
    %2141 = vmatpush2.bf16.msra.mxu0 0
    %2142 = vmatprep.subr.bf16.mxu0 0
    %2143 = vmatpush2.bf16.msra.mxu0 0
    %2144 = vmatprep.subr.bf16.mxu0 0
    %2145 = vmatpush2.bf16.msra.mxu0 0
    %2146 = vmatprep.mubr.bf16.mxu0 0
    %2147 = vmatmul.mubr.bf16.gmra.mxu0 %v2112
    %v2148 = vpop.f32.mrf.mxu0
    %v2149 = vadd.f32 %v2099, %v2148
    %v2150 = vpop.f32.mrf.mxu0
    %v2151 = vpop.f32.mrf.mxu0
    %v2152 = vadd.f32 %v2102, %v2151
    %v2153 = vpop.f32.mrf.mxu0
    %2154 = vdwg.mxu0
    %v2155 = vld [vmem:[%s11 + $0x11] ss:$0 sm:$0xff]
    %v2156 = vadd.f32 %v2149, %v2155
    %v2157 = vadd.f32 %v2152, %v2155
    %v2158 = vpack.c.bf16 %v2157, %v2156
    %v2160 = vunpack.c.l.b16 %v2158
    %v2161 = vunpack.c.h.b16 %v2158
    %v2162 = vpack.c.b16 %v2160, %v2160
    %v2163 = vpack.c.b16 %v2161, %v2161
    %2166 = vst [vmem:[#allocation5] sm:$0xf] %v2162
    %2167 = vst [vmem:[#allocation5 + $0x4] sm:$0xf] %v2163
    // Predicated region
    $region54: #{tpu_custom_call.1} parent=1 // pred_check
      _
    $region55: #{tpu_custom_call.1} parent=1 // pred_check_branch
      %2169 = sbr.rel (0) target = $region57
    $region56: #{tpu_custom_call.1} parent=1 // pred_region
      %s2171 = ssub.s32 128, 128
      %2172 = vsyncadd [#allocation4], %s2171
      %s2173 = sshll.u32 [#allocation5], 4
      %s2174 = int_to_ptr.vmem [resolvable:$true] %s2173
      %2179 = dma.vmem_to_hbm [thread:$0]  %s2174, 128, %s12, [#allocation4], 64, 64, 4
    $region57: #{tpu_custom_call.1} parent=1 // pred_fallthru
      _
    // Predicated region
    $region58: #{tpu_custom_call.1} parent=1 // pred_check
      _
    $region59: #{tpu_custom_call.1} parent=1 // pred_check_branch
      %2181 = sbr.rel (0) target = $region61
    $region60: #{tpu_custom_call.1} parent=1 // pred_region
      %2182 = dma.done [#allocation4], 128
    $region61: #{tpu_custom_call.1} parent=1 // pred_fallthru
      _
    %2183 = vsyncpa [#allocation3], 1
    %2184 = vsyncpa [#allocation4], 1

</llo_original>
